<compile_context>
chip_gen: v6e
topology: v6e:2x2x1
jax: 0.10.0
libtpu: 0.0.40
codegen_flags: <defaults>
</compile_context>

<pallas_src>
import jax
import jax.numpy as jnp
from jax import lax
from jax.experimental import pallas as pl
from jax.experimental.pallas import tpu as pltpu

NUM_CLASSES = 2
OUT_PAD = 128          # lane-padded final output width (multiple of 128)
H1 = 512
H2 = 256


def _round_up(x, m):
    return ((x + m - 1) // m) * m


def _tpu_vmem_info():
    """(vmem_capacity_bytes, tensorcores_per_chip) with safe fallbacks."""
    try:
        vmem_cap = int(pltpu.get_tpu_info().vmem_capacity_bytes)
    except Exception:
        try:
            kind = jax.devices()[0].device_kind.lower()
            vmem_cap = 64 * 2**20 if "7" in kind else 128 * 2**20
        except Exception:
            vmem_cap = 128 * 2**20
    # v7x: 64 MiB VMEM per TC and 2 TCs/chip; v5e/v6e: 128 MiB, 1 TC.
    n_tc = 2 if vmem_cap <= 96 * 2**20 else 1
    return vmem_cap, n_tc


def _make_kernel(d_actual, tk, mask_k_tail):
    """Fused 3-layer MLP.  Grid = (batch tiles, layer-1 K tiles)."""

    def kernel(x_ref, w1_ref, b1_ref, w2_ref, b2_ref, w3_ref, b3_ref, o_ref,
               h1_acc):
        k = pl.program_id(1)

        @pl.when(k == 0)
        def _():
            h1_acc[...] = jnp.zeros_like(h1_acc)

        xb = x_ref[...].astype(w1_ref.dtype)   # no-op when x is already bf16
        if mask_k_tail:
            # Zero the OOB K-tail of the x tile (x is NOT padded in HBM);
            # cheap VPU selects hidden under the MXU work.
            col = k * tk + lax.broadcasted_iota(jnp.int32, xb.shape, 1)
            xb = jnp.where(col < d_actual, xb, jnp.zeros_like(xb))

        # layer-1 partial product: (tb, tk) @ (tk, 512), f32 accumulation
        h1_acc[...] += jnp.dot(xb, w1_ref[...],
                               preferred_element_type=jnp.float32)

        @pl.when(k == pl.num_programs(1) - 1)
        def _():
            # layer 1 bias + ReLU
            h1 = jnp.maximum(h1_acc[...] + b1_ref[...], 0.0)
            # layer 2: (tb, 512) @ (512, 256) + b2, ReLU
            h2 = jnp.dot(h1.astype(w2_ref.dtype), w2_ref[...],
                         preferred_element_type=jnp.float32)
            h2 = jnp.maximum(h2 + b2_ref[...], 0.0)
            # layer 3 (lane-padded to 128): (tb, 256) @ (256, 128) + b3
            logits = jnp.dot(h2.astype(w3_ref.dtype), w3_ref[...],
                             preferred_element_type=jnp.float32)
            o_ref[...] = (logits + b3_ref[...]).astype(o_ref.dtype)

    return kernel


def linear_svc_forward(x, params, *, batch_tile=None, k_tile=4096):
    """y = relu(x@W1+b1); y = relu(y@W2+b2); logits = y@W3+b3.

    x: (B, D), ideally bf16 (produced upstream); f32 also works.
    """
    w1, b1, w2, b2, w3, b3 = params
    B, D = x.shape
    assert w1.shape == (D, H1)

    vmem_cap, n_tc = _tpu_vmem_info()
    is_v7x = vmem_cap <= 96 * 2**20

    # ---- batch tiling: no padding / HBM copy of x.
    if batch_tile is None:
        batch_tile = 256 if is_v7x else 512       # W1 re-streamed once per tile
    if B <= batch_tile:
        tb = B                                    # full-dim block: always legal
    else:
        tb = _round_up(batch_tile, 16)            # bf16 sublane tile is 16
    # v7x: keep >= 2 batch blocks so both TensorCores get work.
    if n_tc >= 2 and B > 256:
        tb = min(tb, _round_up(-(-B // n_tc), 16))
    grid_b = -(-B // tb)

    # ---- layer-1 K tiling: single tile up to D=8192, else 4096-wide tiles.
    if D <= 8192:
        tk = _round_up(D, 128)
    else:
        tk = _round_up(k_tile, 128)
    d_pad = _round_up(D, tk)
    grid_k = d_pad // tk
    mask_k_tail = (D % tk) != 0

    # Only W1 is zero-padded along K (parameter-side; x stays untouched).
    w1p = jnp.pad(w1, ((0, d_pad - D), (0, 0))) if d_pad != D else w1
    # lane-pad the tiny (256, 2) head to a full 128-lane output slab
    w3p = jnp.pad(w3, ((0, 0), (0, OUT_PAD - NUM_CLASSES)))
    b3p = jnp.pad(b3, ((0, 0), (0, OUT_PAD - NUM_CLASSES)))

    kernel = _make_kernel(D, tk, mask_k_tail)
    grid = (grid_b, grid_k)

    x_bytes = jnp.dtype(x.dtype).itemsize
    w_bytes = jnp.dtype(w1.dtype).itemsize

    def run(single_buffer_consts):
        const_buf = 1 if single_buffer_consts else 2
        vmem_est = (2 * tb * tk * x_bytes                        # x tile (dbl buf)
                    + 2 * tk * H1 * w_bytes                      # W1 K-tile
                    + const_buf * (H1 * H2 + H2 * OUT_PAD) * w_bytes   # W2, W3
                    + const_buf * (H1 + H2 + OUT_PAD) * 4        # biases
                    + tb * H1 * 4                                # layer-1 accumulator
                    + 2 * tb * (H1 + H2) * 4                     # h1/h2 temporaries
                    + 2 * tb * OUT_PAD * 4)                      # output tile
        vmem_cap_lim = 48 * 2**20 if is_v7x else 100 * 2**20
        vmem_limit = int(min(vmem_cap_lim, max(32 * 2**20, 2 * vmem_est)))

        cs = dict(pipeline_mode=pl.Buffered(1)) if single_buffer_consts else {}
        in_specs = [
            pl.BlockSpec((tb, tk), lambda i, k: (i, k)),          # x tile
            pl.BlockSpec((tk, H1), lambda i, k: (k, 0)),          # W1 K-tile
            pl.BlockSpec((1, H1), lambda i, k: (0, 0), **cs),     # b1
            pl.BlockSpec((H1, H2), lambda i, k: (0, 0), **cs),    # W2
            pl.BlockSpec((1, H2), lambda i, k: (0, 0), **cs),     # b2
            pl.BlockSpec((H2, OUT_PAD), lambda i, k: (0, 0), **cs),  # W3 (padded)
            pl.BlockSpec((1, OUT_PAD), lambda i, k: (0, 0), **cs),   # b3 (padded)
        ]
        return pl.pallas_call(
            kernel,
            out_shape=jax.ShapeDtypeStruct((B, OUT_PAD), jnp.float32),
            grid=grid,
            in_specs=in_specs,
            out_specs=pl.BlockSpec((tb, OUT_PAD), lambda i, k: (i, 0)),
            scratch_shapes=[pltpu.VMEM((tb, H1), jnp.float32)],
            compiler_params=pltpu.CompilerParams(
                dimension_semantics=("parallel", "arbitrary"),
                vmem_limit_bytes=vmem_limit,
            ),
        )(x, w1p, b1, w2, b2, w3p, b3p)

    try:
        # Preferred path: constant operands single-buffered (free VMEM reclaim).
        out = jax.block_until_ready(run(True))
    except Exception:
        # Fallback if this JAX/Mosaic build rejects pipeline_mode=Buffered(1).
        out = run(False)

    return out[:, :NUM_CLASSES]


def init_params(key, input_dim, *, param_dtype=jnp.bfloat16):
    """Torch-Linear-style U(-1/sqrt(fan_in), +bound) init.  Weights stored as
    (in, out) so the kernel computes y = x @ W + b.  Weights bf16, biases f32."""
    ks = jax.random.split(key, 6)

    def lin(kw, kb, fan_in, fan_out):
        bound = 1.0 / float(fan_in) ** 0.5
        w = jax.random.uniform(kw, (fan_in, fan_out), jnp.float32, -bound, bound)
        b = jax.random.uniform(kb, (1, fan_out), jnp.float32, -bound, bound)
        return w.astype(param_dtype), b

    w1, b1 = lin(ks[0], ks[1], input_dim, H1)
    w2, b2 = lin(ks[2], ks[3], H1, H2)
    w3, b3 = lin(ks[4], ks[5], H2, NUM_CLASSES)
    return (w1, b1, w2, b2, w3, b3)


def reference_forward(x, params):
    """Plain-JAX reference with the same bf16-weight / f32-accumulate math."""
    w1, b1, w2, b2, w3, b3 = params
    h = jnp.dot(x.astype(w1.dtype), w1, preferred_element_type=jnp.float32) + b1
    h = jnp.maximum(h, 0.0)
    h = jnp.dot(h.astype(w2.dtype), w2, preferred_element_type=jnp.float32) + b2
    h = jnp.maximum(h, 0.0)
    return jnp.dot(h.astype(w3.dtype), w3, preferred_element_type=jnp.float32) + b3


if __name__ == "__main__":
    key = jax.random.PRNGKey(0)
    k_x, k_p = jax.random.split(key)

    batch = 8
    input_dim = 128  # synthetic feature dim (e.g. TF-IDF / embedding size)

    # x produced upstream in bf16 (halves the dominant HBM stream; the
    # in-kernel astype is then a no-op).  No wrapper-side cast.
    x = jax.random.normal(k_x, (batch, input_dim), jnp.bfloat16)
    params = init_params(k_p, input_dim)

    out = linear_svc_forward(x, params)
    out = jax.block_until_ready(out)

    ref = reference_forward(x, params)
    assert out.shape == (batch, NUM_CLASSES)
    assert jnp.allclose(out, ref, atol=2e-2, rtol=2e-2), (
        f"max abs err {jnp.max(jnp.abs(out - ref))}")

    print("KERNEL_OK")
</pallas_src>

<mosaic_0001>
module attributes {stable_mosaic.version = 11 : i64} {
  func.func @kernel(%arg0: i32, %arg1: i32, %arg2: memref<8x128xbf16, #tpu.memory_space<vmem>>, %arg3: memref<128x512xbf16, #tpu.memory_space<vmem>>, %arg4: memref<1x512xf32, #tpu.memory_space<vmem>>, %arg5: memref<512x256xbf16, #tpu.memory_space<vmem>>, %arg6: memref<1x256xf32, #tpu.memory_space<vmem>>, %arg7: memref<256x128xbf16, #tpu.memory_space<vmem>>, %arg8: memref<1x128xf32, #tpu.memory_space<vmem>>, %arg9: memref<8x128xf32, #tpu.memory_space<vmem>>, %arg10: memref<8x512xf32, #tpu.memory_space<vmem>>) attributes {dimension_semantics = [#tpu.dimension_semantics<parallel>, #tpu.dimension_semantics<arbitrary>], iteration_bounds = array<i64: 1, 1>, scalar_prefetch = 0 : i64, scratch_operands = 1 : i64, tpu.core_type = #tpu.core_type<tc>, window_params = [{transform_indices = @transform_0, window_bounds = array<i64: 8, 128>}, {transform_indices = @transform_1, window_bounds = array<i64: 128, 512>}, {pipeline_mode = #tpu.pipeline_mode<synchronous>, transform_indices = @transform_2, window_bounds = array<i64: 1, 512>}, {pipeline_mode = #tpu.pipeline_mode<synchronous>, transform_indices = @transform_3, window_bounds = array<i64: 512, 256>}, {pipeline_mode = #tpu.pipeline_mode<synchronous>, transform_indices = @transform_4, window_bounds = array<i64: 1, 256>}, {pipeline_mode = #tpu.pipeline_mode<synchronous>, transform_indices = @transform_5, window_bounds = array<i64: 256, 128>}, {pipeline_mode = #tpu.pipeline_mode<synchronous>, transform_indices = @transform_6, window_bounds = array<i64: 1, 128>}, {transform_indices = @transform_7, window_bounds = array<i64: 8, 128>}]} {
    %c0_i32 = arith.constant 0 : i32
    %0 = arith.cmpi eq, %arg1, %c0_i32 : i32
    %1 = arith.extui %0 : i1 to i32
    %c0_i32_0 = arith.constant 0 : i32
    %2 = arith.cmpi ne, %1, %c0_i32_0 : i32
    scf.if %2 {
      %cst_10 = arith.constant 0.000000e+00 : f32
      %12 = vector.broadcast %cst_10 : f32 to vector<8x512xf32>
      %c0_11 = arith.constant 0 : index
      %c0_12 = arith.constant 0 : index
      %13 = vector.load %arg10[%c0_11, %c0_12] : memref<8x512xf32, #tpu.memory_space<vmem>>, vector<8x512xf32>
      tpu.vector_store %arg10[%c0_11, %c0_12], %12 {strides = array<i32>} : memref<8x512xf32, #tpu.memory_space<vmem>>, vector<8x512xf32>,
    } else {
    }
    %c0 = arith.constant 0 : index
    %c0_1 = arith.constant 0 : index
    %3 = vector.load %arg2[%c0, %c0_1] : memref<8x128xbf16, #tpu.memory_space<vmem>>, vector<8x128xbf16>
    %c0_2 = arith.constant 0 : index
    %c0_3 = arith.constant 0 : index
    %4 = vector.load %arg10[%c0_2, %c0_3] : memref<8x512xf32, #tpu.memory_space<vmem>>, vector<8x512xf32>
    %c0_4 = arith.constant 0 : index
    %c0_5 = arith.constant 0 : index
    %5 = vector.load %arg3[%c0_4, %c0_5] : memref<128x512xbf16, #tpu.memory_space<vmem>>, vector<128x512xbf16>
    %cst = arith.constant dense<0.000000e+00> : vector<8x512xf32>
    %6 = tpu.matmul %3, %5, %cst {dimension_numbers = #tpu.dot_dimension_numbers<[1], [0], [0], [1], [0, 0, 1, 1], [], []>} : vector<8x128xbf16>, vector<128x512xbf16>, vector<8x512xf32> -> vector<8x512xf32>
    %7 = arith.addf %4, %6 : vector<8x512xf32>
    %c0_6 = arith.constant 0 : index
    %c0_7 = arith.constant 0 : index
    %8 = vector.load %arg10[%c0_6, %c0_7] : memref<8x512xf32, #tpu.memory_space<vmem>>, vector<8x512xf32>
    tpu.vector_store %arg10[%c0_6, %c0_7], %7 {strides = array<i32>} : memref<8x512xf32, #tpu.memory_space<vmem>>, vector<8x512xf32>,
    %c0_i32_8 = arith.constant 0 : i32
    %9 = arith.cmpi eq, %arg1, %c0_i32_8 : i32
    %10 = arith.extui %9 : i1 to i32
    %c0_i32_9 = arith.constant 0 : i32
    %11 = arith.cmpi ne, %10, %c0_i32_9 : i32
    scf.if %11 {
      %c0_10 = arith.constant 0 : index
      %c0_11 = arith.constant 0 : index
      %12 = vector.load %arg10[%c0_10, %c0_11] : memref<8x512xf32, #tpu.memory_space<vmem>>, vector<8x512xf32>
      %c0_12 = arith.constant 0 : index
      %c0_13 = arith.constant 0 : index
      %13 = vector.load %arg4[%c0_12, %c0_13] : memref<1x512xf32, #tpu.memory_space<vmem>>, vector<1x512xf32>
      %14 = vector.broadcast %13 : vector<1x512xf32> to vector<8x512xf32>
      %15 = arith.addf %12, %14 : vector<8x512xf32>
      %cst_14 = arith.constant 0.000000e+00 : f32
      %16 = vector.broadcast %cst_14 : f32 to vector<8x512xf32>
      %17 = arith.maximumf %15, %16 : vector<8x512xf32>
      %18 = arith.truncf %17 : vector<8x512xf32> to vector<8x512xbf16>
      %c0_15 = arith.constant 0 : index
      %c0_16 = arith.constant 0 : index
      %19 = vector.load %arg5[%c0_15, %c0_16] : memref<512x256xbf16, #tpu.memory_space<vmem>>, vector<512x256xbf16>
      %cst_17 = arith.constant dense<0.000000e+00> : vector<8x256xf32>
      %20 = tpu.matmul %18, %19, %cst_17 {dimension_numbers = #tpu.dot_dimension_numbers<[1], [0], [0], [1], [0, 0, 1, 1], [], []>} : vector<8x512xbf16>, vector<512x256xbf16>, vector<8x256xf32> -> vector<8x256xf32>
      %c0_18 = arith.constant 0 : index
      %c0_19 = arith.constant 0 : index
      %21 = vector.load %arg6[%c0_18, %c0_19] : memref<1x256xf32, #tpu.memory_space<vmem>>, vector<1x256xf32>
      %22 = vector.broadcast %21 : vector<1x256xf32> to vector<8x256xf32>
      %23 = arith.addf %20, %22 : vector<8x256xf32>
      %cst_20 = arith.constant 0.000000e+00 : f32
      %24 = vector.broadcast %cst_20 : f32 to vector<8x256xf32>
      %25 = arith.maximumf %23, %24 : vector<8x256xf32>
      %26 = arith.truncf %25 : vector<8x256xf32> to vector<8x256xbf16>
      %c0_21 = arith.constant 0 : index
      %c0_22 = arith.constant 0 : index
      %27 = vector.load %arg7[%c0_21, %c0_22] : memref<256x128xbf16, #tpu.memory_space<vmem>>, vector<256x128xbf16>
      %cst_23 = arith.constant dense<0.000000e+00> : vector<8x128xf32>
      %28 = tpu.matmul %26, %27, %cst_23 {dimension_numbers = #tpu.dot_dimension_numbers<[1], [0], [0], [1], [0, 0, 1, 1], [], []>} : vector<8x256xbf16>, vector<256x128xbf16>, vector<8x128xf32> -> vector<8x128xf32>
      %c0_24 = arith.constant 0 : index
      %c0_25 = arith.constant 0 : index
      %29 = vector.load %arg8[%c0_24, %c0_25] : memref<1x128xf32, #tpu.memory_space<vmem>>, vector<1x128xf32>
      %30 = vector.broadcast %29 : vector<1x128xf32> to vector<8x128xf32>
      %31 = arith.addf %28, %30 : vector<8x128xf32>
      %c0_26 = arith.constant 0 : index
      %c0_27 = arith.constant 0 : index
      %32 = vector.load %arg9[%c0_26, %c0_27] : memref<8x128xf32, #tpu.memory_space<vmem>>, vector<8x128xf32>
      tpu.vector_store %arg9[%c0_26, %c0_27], %31 {strides = array<i32>} : memref<8x128xf32, #tpu.memory_space<vmem>>, vector<8x128xf32>,
    } else {
    }
    return
  }
  func.func @transform_0(%arg0: i32, %arg1: i32) -> (i32, i32) {
    %c0_i32 = arith.constant 0 : i32
    return %arg0, %arg1 : i32, i32
  }
  func.func @transform_1(%arg0: i32, %arg1: i32) -> (i32, i32) {
    %c0_i32 = arith.constant 0 : i32
    %c0_i32_0 = arith.constant 0 : i32
    return %arg1, %c0_i32 : i32, i32
  }
  func.func @transform_2(%arg0: i32, %arg1: i32) -> (i32, i32) {
    %c0_i32 = arith.constant 0 : i32
    %c0_i32_0 = arith.constant 0 : i32
    %c0_i32_1 = arith.constant 0 : i32
    return %c0_i32, %c0_i32_0 : i32, i32
  }
  func.func @transform_3(%arg0: i32, %arg1: i32) -> (i32, i32) {
    %c0_i32 = arith.constant 0 : i32
    %c0_i32_0 = arith.constant 0 : i32
    %c0_i32_1 = arith.constant 0 : i32
    return %c0_i32, %c0_i32_0 : i32, i32
  }
  func.func @transform_4(%arg0: i32, %arg1: i32) -> (i32, i32) {
    %c0_i32 = arith.constant 0 : i32
    %c0_i32_0 = arith.constant 0 : i32
    %c0_i32_1 = arith.constant 0 : i32
    return %c0_i32, %c0_i32_0 : i32, i32
  }
  func.func @transform_5(%arg0: i32, %arg1: i32) -> (i32, i32) {
    %c0_i32 = arith.constant 0 : i32
    %c0_i32_0 = arith.constant 0 : i32
    %c0_i32_1 = arith.constant 0 : i32
    return %c0_i32, %c0_i32_0 : i32, i32
  }
  func.func @transform_6(%arg0: i32, %arg1: i32) -> (i32, i32) {
    %c0_i32 = arith.constant 0 : i32
    %c0_i32_0 = arith.constant 0 : i32
    %c0_i32_1 = arith.constant 0 : i32
    return %c0_i32, %c0_i32_0 : i32, i32
  }
  func.func @transform_7(%arg0: i32, %arg1: i32) -> (i32, i32) {
    %c0_i32 = arith.constant 0 : i32
    %c0_i32_0 = arith.constant 0 : i32
    return %arg0, %c0_i32 : i32, i32
  }
}

module attributes {stable_mosaic.version = 11 : i64} {
  func.func @kernel(%arg0: i32, %arg1: i32, %arg2: memref<8x128xbf16, #tpu.memory_space<vmem>>, %arg3: memref<128x512xbf16, #tpu.memory_space<vmem>>, %arg4: memref<1x512xf32, #tpu.memory_space<vmem>>, %arg5: memref<512x256xbf16, #tpu.memory_space<vmem>>, %arg6: memref<1x256xf32, #tpu.memory_space<vmem>>, %arg7: memref<256x128xbf16, #tpu.memory_space<vmem>>, %arg8: memref<1x128xf32, #tpu.memory_space<vmem>>, %arg9: memref<8x128xf32, #tpu.memory_space<vmem>>, %arg10: memref<8x512xf32, #tpu.memory_space<vmem>>) attributes {dimension_semantics = [#tpu.dimension_semantics<parallel>, #tpu.dimension_semantics<arbitrary>], iteration_bounds = array<i64: 1, 1>, scalar_prefetch = 0 : i64, scratch_operands = 1 : i64, tpu.core_type = #tpu.core_type<tc>, window_params = [{transform_indices = @transform_0, window_bounds = array<i64: 8, 128>}, {transform_indices = @transform_1, window_bounds = array<i64: 128, 512>}, {pipeline_mode = #tpu.pipeline_mode<synchronous>, transform_indices = @transform_2, window_bounds = array<i64: 1, 512>}, {pipeline_mode = #tpu.pipeline_mode<synchronous>, transform_indices = @transform_3, window_bounds = array<i64: 512, 256>}, {pipeline_mode = #tpu.pipeline_mode<synchronous>, transform_indices = @transform_4, window_bounds = array<i64: 1, 256>}, {pipeline_mode = #tpu.pipeline_mode<synchronous>, transform_indices = @transform_5, window_bounds = array<i64: 256, 128>}, {pipeline_mode = #tpu.pipeline_mode<synchronous>, transform_indices = @transform_6, window_bounds = array<i64: 1, 128>}, {transform_indices = @transform_7, window_bounds = array<i64: 8, 128>}]} {
    %c0_i32 = arith.constant 0 : i32
    %0 = arith.cmpi eq, %arg1, %c0_i32 : i32
    %1 = arith.extui %0 : i1 to i32
    %c0_i32_0 = arith.constant 0 : i32
    %2 = arith.cmpi ne, %1, %c0_i32_0 : i32
    scf.if %2 {
      %cst_10 = arith.constant 0.000000e+00 : f32
      %12 = vector.broadcast %cst_10 : f32 to vector<8x512xf32>
      %c0_11 = arith.constant 0 : index
      %c0_12 = arith.constant 0 : index
      %13 = vector.load %arg10[%c0_11, %c0_12] : memref<8x512xf32, #tpu.memory_space<vmem>>, vector<8x512xf32>
      tpu.vector_store %arg10[%c0_11, %c0_12], %12 {strides = array<i32>} : memref<8x512xf32, #tpu.memory_space<vmem>>, vector<8x512xf32>,
    } else {
    }
    %c0 = arith.constant 0 : index
    %c0_1 = arith.constant 0 : index
    %3 = vector.load %arg2[%c0, %c0_1] : memref<8x128xbf16, #tpu.memory_space<vmem>>, vector<8x128xbf16>
    %c0_2 = arith.constant 0 : index
    %c0_3 = arith.constant 0 : index
    %4 = vector.load %arg10[%c0_2, %c0_3] : memref<8x512xf32, #tpu.memory_space<vmem>>, vector<8x512xf32>
    %c0_4 = arith.constant 0 : index
    %c0_5 = arith.constant 0 : index
    %5 = vector.load %arg3[%c0_4, %c0_5] : memref<128x512xbf16, #tpu.memory_space<vmem>>, vector<128x512xbf16>
    %cst = arith.constant dense<0.000000e+00> : vector<8x512xf32>
    %6 = tpu.matmul %3, %5, %cst {dimension_numbers = #tpu.dot_dimension_numbers<[1], [0], [0], [1], [0, 0, 1, 1], [], []>} : vector<8x128xbf16>, vector<128x512xbf16>, vector<8x512xf32> -> vector<8x512xf32>
    %7 = arith.addf %4, %6 : vector<8x512xf32>
    %c0_6 = arith.constant 0 : index
    %c0_7 = arith.constant 0 : index
    %8 = vector.load %arg10[%c0_6, %c0_7] : memref<8x512xf32, #tpu.memory_space<vmem>>, vector<8x512xf32>
    tpu.vector_store %arg10[%c0_6, %c0_7], %7 {strides = array<i32>} : memref<8x512xf32, #tpu.memory_space<vmem>>, vector<8x512xf32>,
    %c0_i32_8 = arith.constant 0 : i32
    %9 = arith.cmpi eq, %arg1, %c0_i32_8 : i32
    %10 = arith.extui %9 : i1 to i32
    %c0_i32_9 = arith.constant 0 : i32
    %11 = arith.cmpi ne, %10, %c0_i32_9 : i32
    scf.if %11 {
      %c0_10 = arith.constant 0 : index
      %c0_11 = arith.constant 0 : index
      %12 = vector.load %arg10[%c0_10, %c0_11] : memref<8x512xf32, #tpu.memory_space<vmem>>, vector<8x512xf32>
      %c0_12 = arith.constant 0 : index
      %c0_13 = arith.constant 0 : index
      %13 = vector.load %arg4[%c0_12, %c0_13] : memref<1x512xf32, #tpu.memory_space<vmem>>, vector<1x512xf32>
      %14 = vector.broadcast %13 : vector<1x512xf32> to vector<8x512xf32>
      %15 = arith.addf %12, %14 : vector<8x512xf32>
      %cst_14 = arith.constant 0.000000e+00 : f32
      %16 = vector.broadcast %cst_14 : f32 to vector<8x512xf32>
      %17 = arith.maximumf %15, %16 : vector<8x512xf32>
      %18 = arith.truncf %17 : vector<8x512xf32> to vector<8x512xbf16>
      %c0_15 = arith.constant 0 : index
      %c0_16 = arith.constant 0 : index
      %19 = vector.load %arg5[%c0_15, %c0_16] : memref<512x256xbf16, #tpu.memory_space<vmem>>, vector<512x256xbf16>
      %cst_17 = arith.constant dense<0.000000e+00> : vector<8x256xf32>
      %20 = tpu.matmul %18, %19, %cst_17 {dimension_numbers = #tpu.dot_dimension_numbers<[1], [0], [0], [1], [0, 0, 1, 1], [], []>} : vector<8x512xbf16>, vector<512x256xbf16>, vector<8x256xf32> -> vector<8x256xf32>
      %c0_18 = arith.constant 0 : index
      %c0_19 = arith.constant 0 : index
      %21 = vector.load %arg6[%c0_18, %c0_19] : memref<1x256xf32, #tpu.memory_space<vmem>>, vector<1x256xf32>
      %22 = vector.broadcast %21 : vector<1x256xf32> to vector<8x256xf32>
      %23 = arith.addf %20, %22 : vector<8x256xf32>
      %cst_20 = arith.constant 0.000000e+00 : f32
      %24 = vector.broadcast %cst_20 : f32 to vector<8x256xf32>
      %25 = arith.maximumf %23, %24 : vector<8x256xf32>
      %26 = arith.truncf %25 : vector<8x256xf32> to vector<8x256xbf16>
      %c0_21 = arith.constant 0 : index
      %c0_22 = arith.constant 0 : index
      %27 = vector.load %arg7[%c0_21, %c0_22] : memref<256x128xbf16, #tpu.memory_space<vmem>>, vector<256x128xbf16>
      %cst_23 = arith.constant dense<0.000000e+00> : vector<8x128xf32>
      %28 = tpu.matmul %26, %27, %cst_23 {dimension_numbers = #tpu.dot_dimension_numbers<[1], [0], [0], [1], [0, 0, 1, 1], [], []>} : vector<8x256xbf16>, vector<256x128xbf16>, vector<8x128xf32> -> vector<8x128xf32>
      %c0_24 = arith.constant 0 : index
      %c0_25 = arith.constant 0 : index
      %29 = vector.load %arg8[%c0_24, %c0_25] : memref<1x128xf32, #tpu.memory_space<vmem>>, vector<1x128xf32>
      %30 = vector.broadcast %29 : vector<1x128xf32> to vector<8x128xf32>
      %31 = arith.addf %28, %30 : vector<8x128xf32>
      %c0_26 = arith.constant 0 : index
      %c0_27 = arith.constant 0 : index
      %32 = vector.load %arg9[%c0_26, %c0_27] : memref<8x128xf32, #tpu.memory_space<vmem>>, vector<8x128xf32>
      tpu.vector_store %arg9[%c0_26, %c0_27], %31 {strides = array<i32>} : memref<8x128xf32, #tpu.memory_space<vmem>>, vector<8x128xf32>,
    } else {
    }
    return
  }
  func.func @transform_0(%arg0: i32, %arg1: i32) -> (i32, i32) {
    %c0_i32 = arith.constant 0 : i32
    return %arg0, %arg1 : i32, i32
  }
  func.func @transform_1(%arg0: i32, %arg1: i32) -> (i32, i32) {
    %c0_i32 = arith.constant 0 : i32
    %c0_i32_0 = arith.constant 0 : i32
    return %arg1, %c0_i32 : i32, i32
  }
  func.func @transform_2(%arg0: i32, %arg1: i32) -> (i32, i32) {
    %c0_i32 = arith.constant 0 : i32
    %c0_i32_0 = arith.constant 0 : i32
    %c0_i32_1 = arith.constant 0 : i32
    return %c0_i32, %c0_i32_0 : i32, i32
  }
  func.func @transform_3(%arg0: i32, %arg1: i32) -> (i32, i32) {
    %c0_i32 = arith.constant 0 : i32
    %c0_i32_0 = arith.constant 0 : i32
    %c0_i32_1 = arith.constant 0 : i32
    return %c0_i32, %c0_i32_0 : i32, i32
  }
  func.func @transform_4(%arg0: i32, %arg1: i32) -> (i32, i32) {
    %c0_i32 = arith.constant 0 : i32
    %c0_i32_0 = arith.constant 0 : i32
    %c0_i32_1 = arith.constant 0 : i32
    return %c0_i32, %c0_i32_0 : i32, i32
  }
  func.func @transform_5(%arg0: i32, %arg1: i32) -> (i32, i32) {
    %c0_i32 = arith.constant 0 : i32
    %c0_i32_0 = arith.constant 0 : i32
    %c0_i32_1 = arith.constant 0 : i32
    return %c0_i32, %c0_i32_0 : i32, i32
  }
  func.func @transform_6(%arg0: i32, %arg1: i32) -> (i32, i32) {
    %c0_i32 = arith.constant 0 : i32
    %c0_i32_0 = arith.constant 0 : i32
    %c0_i32_1 = arith.constant 0 : i32
    return %c0_i32, %c0_i32_0 : i32, i32
  }
  func.func @transform_7(%arg0: i32, %arg1: i32) -> (i32, i32) {
    %c0_i32 = arith.constant 0 : i32
    %c0_i32_0 = arith.constant 0 : i32
    return %arg0, %c0_i32 : i32, i32
  }
}

</mosaic_0001>

<llo_original>
// kernel: tpu_custom_call.1
$region0: #{tpu_custom_call.1}
  #allocation0 [shape = 'u32[]', space=smem, size = 0x4, offset = 0x4, fixed_abs, tag = 'smem constant byte address 0x4 - core index']
  #allocation1 [shape = 'u32[144,128]{1,0:T(1,128)}', space=vmem, size = 0x12000, scoped, tag = 'internal scratch']
  #allocation2 [shape = 'f32[8,512]{1,0:T(8,128)}', space=vmem, size = 0x4000, scoped, tag = 'scratch operand']
  %s0 = inlined_call_operand.hbm [shape: bf16[8,128], index: 0, kind: input, shape index: {}]
  %s1 = inlined_call_operand.hbm [shape: bf16[128,512], index: 1, kind: input, shape index: {}]
  %s2 = inlined_call_operand.hbm [shape: f32[1,512], index: 2, kind: input, shape index: {}]
  %s3 = inlined_call_operand.hbm [shape: bf16[512,256], index: 3, kind: input, shape index: {}]
  %s4 = inlined_call_operand.vmem [shape: f32[1,256], index: 4, kind: input, shape index: {}]
  %s5 = inlined_call_operand.hbm [shape: bf16[256,128], index: 5, kind: input, shape index: {}]
  %s6 = inlined_call_operand.vmem [shape: f32[1,128], index: 6, kind: input, shape index: {}]
  %s7 = inlined_call_operand.hbm [shape: f32[8,128], index: 7, kind: output, shape index: {}]
  %s8 = sld [smem:[#allocation0]]
  $region66: #{tpu_custom_call.1} parent=0
    _
  %s10 = ssub.s32 1, %s8
  %s11 = scalar_select 0, %s10, %s8
  $region1: #{tpu_custom_call.1} parent=0
    #allocation3 [shape = 'u8[2048]{0}', space=vmem, size = 0x800, scoped, tag = 'input window, operand 0, single buffered']
    #allocation4 [shape = 's32[1]{0}', space=sflag, size = 0x4, scoped, tag = 'scoped memory for tpu_custom_call.1']
    #allocation5 [shape = 's32[1]{0}', space=sflag, size = 0x4, scoped, tag = 'scoped memory for tpu_custom_call.1']
    #allocation6 [shape = 'u8[131072]{0}', space=vmem, size = 0x20000, scoped, tag = 'input window, operand 1, single buffered']
    #allocation7 [shape = 's32[1]{0}', space=sflag, size = 0x4, scoped, tag = 'scoped memory for tpu_custom_call.1']
    #allocation8 [shape = 'u8[2048]{0}', space=vmem, size = 0x800, scoped, tag = 'input window, operand 2, single buffered']
    #allocation9 [shape = 'u8[262144]{0}', space=vmem, size = 0x40000, scoped, tag = 'input window, operand 3, single buffered']
    #allocation10 [shape = 's32[1]{0}', space=sflag, size = 0x4, scoped, tag = 'scoped memory for tpu_custom_call.1']
    #allocation11 [shape = 'u8[65536]{0}', space=vmem, size = 0x10000, scoped, tag = 'input window, operand 5, single buffered']
    #allocation12 [shape = 'u8[4096]{0}', space=vmem, size = 0x1000, scoped, tag = 'output window, operand 0, single buffered']
    %12 = vsyncpa [#allocation4], 0
    %13 = vsyncpa [#allocation7], 0
    %14 = vsyncpa [#allocation10], 0
    %15 = vsyncpa [#allocation5], 0
    // Predicated region
    $region2: #{tpu_custom_call.1} parent=1 // pred_check
      _
    $region3: #{tpu_custom_call.1} parent=1 // pred_check_branch
      %17 = sbr.rel (0) target = $region5
    $region4: #{tpu_custom_call.1} parent=1 // pred_region
      %s19 = ssub.s32 64, 64
      %20 = vsyncadd [#allocation4], %s19
      %s22 = sshll.u32 [#allocation3], 4
      %s23 = int_to_ptr.vmem [resolvable:$true] %s22
      %25 = dma.hbm_to_vmem [thread:$0]  %s0, 64, %s23, [#allocation4]
    $region5: #{tpu_custom_call.1} parent=1 // pred_fallthru
      _
    // Predicated region
    $region6: #{tpu_custom_call.1} parent=1 // pred_check
      _
    $region7: #{tpu_custom_call.1} parent=1 // pred_check_branch
      %27 = sbr.rel (0) target = $region9
    $region8: #{tpu_custom_call.1} parent=1 // pred_region
      %s29 = ssub.s32 4096, 4096
      %30 = vsyncadd [#allocation7], %s29
      %s31 = sshll.u32 [#allocation6], 4
      %s32 = int_to_ptr.vmem [resolvable:$true] %s31
      %37 = dma.hbm_to_vmem [thread:$0]  %s1, 4096, %s32, [#allocation7], 256, 256, 16
    $region9: #{tpu_custom_call.1} parent=1 // pred_fallthru
      _
    // Predicated region
    $region10: #{tpu_custom_call.1} parent=1 // pred_check
      _
    $region11: #{tpu_custom_call.1} parent=1 // pred_check_branch
      %39 = sbr.rel (0) target = $region13
    $region12: #{tpu_custom_call.1} parent=1 // pred_region
      %s41 = ssub.s32 64, 64
      %42 = vsyncadd [#allocation7], %s41
      %s44 = sshll.u32 [#allocation8], 4
      %s45 = int_to_ptr.vmem [resolvable:$true] %s44
      %47 = dma.hbm_to_vmem [thread:$0]  %s2, 64, %s45, [#allocation7]
    $region13: #{tpu_custom_call.1} parent=1 // pred_fallthru
      _
    // Predicated region
    $region14: #{tpu_custom_call.1} parent=1 // pred_check
      _
    $region15: #{tpu_custom_call.1} parent=1 // pred_check_branch
      %49 = sbr.rel (0) target = $region17
    $region16: #{tpu_custom_call.1} parent=1 // pred_region
      %s51 = ssub.s32 8192, 8192
      %52 = vsyncadd [#allocation10], %s51
      %s53 = sshll.u32 [#allocation9], 4
      %s54 = int_to_ptr.vmem [resolvable:$true] %s53
      %59 = dma.hbm_to_vmem [thread:$0]  %s3, 8192, %s54, [#allocation10], 128, 128, 8
    $region17: #{tpu_custom_call.1} parent=1 // pred_fallthru
      _
    // Predicated region
    $region18: #{tpu_custom_call.1} parent=1 // pred_check
      _
    $region19: #{tpu_custom_call.1} parent=1 // pred_check_branch
      %61 = sbr.rel (0) target = $region21
    $region20: #{tpu_custom_call.1} parent=1 // pred_region
      _
    $region21: #{tpu_custom_call.1} parent=1 // pred_fallthru
      _
    // Predicated region
    $region22: #{tpu_custom_call.1} parent=1 // pred_check
      _
    $region23: #{tpu_custom_call.1} parent=1 // pred_check_branch
      %63 = sbr.rel (0) target = $region25
    $region24: #{tpu_custom_call.1} parent=1 // pred_region
      %s65 = ssub.s32 2048, 2048
      %66 = vsyncadd [#allocation10], %s65
      %s67 = sshll.u32 [#allocation11], 4
      %s68 = int_to_ptr.vmem [resolvable:$true] %s67
      %73 = dma.hbm_to_vmem [thread:$0]  %s5, 2048, %s68, [#allocation10], 64, 64, 4
    $region25: #{tpu_custom_call.1} parent=1 // pred_fallthru
      _
    // Predicated region
    $region26: #{tpu_custom_call.1} parent=1 // pred_check
      _
    $region27: #{tpu_custom_call.1} parent=1 // pred_check_branch
      %75 = sbr.rel (0) target = $region29
    $region28: #{tpu_custom_call.1} parent=1 // pred_region
      _
    $region29: #{tpu_custom_call.1} parent=1 // pred_fallthru
      _
    // Predicated region
    $region30: #{tpu_custom_call.1} parent=1 // pred_check
      _
    $region31: #{tpu_custom_call.1} parent=1 // pred_check_branch
      %77 = sbr.rel (0) target = $region33
    $region32: #{tpu_custom_call.1} parent=1 // pred_region
      %78 = dma.done [#allocation4], 64
    $region33: #{tpu_custom_call.1} parent=1 // pred_fallthru
      _
    // Predicated region
    $region34: #{tpu_custom_call.1} parent=1 // pred_check
      _
    $region35: #{tpu_custom_call.1} parent=1 // pred_check_branch
      %80 = sbr.rel (0) target = $region37
    $region36: #{tpu_custom_call.1} parent=1 // pred_region
      %81 = dma.done [#allocation7], 4096
    $region37: #{tpu_custom_call.1} parent=1 // pred_fallthru
      _
    // Predicated region
    $region38: #{tpu_custom_call.1} parent=1 // pred_check
      _
    $region39: #{tpu_custom_call.1} parent=1 // pred_check_branch
      %83 = sbr.rel (0) target = $region41
    $region40: #{tpu_custom_call.1} parent=1 // pred_region
      %84 = dma.done [#allocation7], 64
    $region41: #{tpu_custom_call.1} parent=1 // pred_fallthru
      _
    // Predicated region
    $region42: #{tpu_custom_call.1} parent=1 // pred_check
      _
    $region43: #{tpu_custom_call.1} parent=1 // pred_check_branch
      %86 = sbr.rel (0) target = $region45
    $region44: #{tpu_custom_call.1} parent=1 // pred_region
      %87 = dma.done [#allocation10], 8192
    $region45: #{tpu_custom_call.1} parent=1 // pred_fallthru
      _
    // Predicated region
    $region46: #{tpu_custom_call.1} parent=1 // pred_check
      _
    $region47: #{tpu_custom_call.1} parent=1 // pred_check_branch
      %89 = sbr.rel (0) target = $region49
    $region48: #{tpu_custom_call.1} parent=1 // pred_region
      %90 = dma.done [#allocation10], 2048
    $region49: #{tpu_custom_call.1} parent=1 // pred_fallthru
      _
    %p92 = scmp.eq.s32.totalorder 0, 0
    // Predicated region
    $region50: #{tpu_custom_call.1} parent=1 // pred_check
      %p93 = pneg %p92
    $region51: #{tpu_custom_call.1} parent=1 // pred_check_branch
      %95 = sbr.rel (%p93) target = $region53
    $region52: #{tpu_custom_call.1} parent=1 // pred_region
      %96 = vst [vmem:[#allocation2] sm:$0xff] 0.0
      %97 = vst [vmem:[#allocation2 + $0x8] sm:$0xff] 0.0
      %98 = vst [vmem:[#allocation2 + $0x10] sm:$0xff] 0.0
      %99 = vst [vmem:[#allocation2 + $0x18] sm:$0xff] 0.0
    $region53: #{tpu_custom_call.1} parent=1 // pred_fallthru
      _
    %v100 = vld [vmem:[#allocation3] sm:$0xf]
    %v101 = vld [vmem:[#allocation2] sm:$0xff]
    %v102 = vld [vmem:[#allocation2 + $0x8] sm:$0xff]
    %v103 = vld [vmem:[#allocation2 + $0x10] sm:$0xff]
    %v104 = vld [vmem:[#allocation2 + $0x18] sm:$0xff]
    %v105 = vld [vmem:[#allocation6] sm:$0xff]
    %v106 = vld [vmem:[#allocation6 + $0x8] sm:$0xff]
    %v107 = vld [vmem:[#allocation6 + $0x10] sm:$0xff]
    %v108 = vld [vmem:[#allocation6 + $0x18] sm:$0xff]
    %v109 = vld [vmem:[#allocation6 + $0x20] sm:$0xff]
    %v110 = vld [vmem:[#allocation6 + $0x28] sm:$0xff]
    %v111 = vld [vmem:[#allocation6 + $0x30] sm:$0xff]
    %v112 = vld [vmem:[#allocation6 + $0x38] sm:$0xff]
    %v113 = vld [vmem:[#allocation6 + $0x40] sm:$0xff]
    %v114 = vld [vmem:[#allocation6 + $0x48] sm:$0xff]
    %v115 = vld [vmem:[#allocation6 + $0x50] sm:$0xff]
    %v116 = vld [vmem:[#allocation6 + $0x58] sm:$0xff]
    %v117 = vld [vmem:[#allocation6 + $0x60] sm:$0xff]
    %v118 = vld [vmem:[#allocation6 + $0x68] sm:$0xff]
    %v119 = vld [vmem:[#allocation6 + $0x70] sm:$0xff]
    %v120 = vld [vmem:[#allocation6 + $0x78] sm:$0xff]
    %v121 = vld [vmem:[#allocation6 + $0x80] sm:$0xff]
    %v122 = vld [vmem:[#allocation6 + $0x88] sm:$0xff]
    %v123 = vld [vmem:[#allocation6 + $0x90] sm:$0xff]
    %v124 = vld [vmem:[#allocation6 + $0x98] sm:$0xff]
    %v125 = vld [vmem:[#allocation6 + $0xa0] sm:$0xff]
    %v126 = vld [vmem:[#allocation6 + $0xa8] sm:$0xff]
    %v127 = vld [vmem:[#allocation6 + $0xb0] sm:$0xff]
    %v128 = vld [vmem:[#allocation6 + $0xb8] sm:$0xff]
    %v129 = vld [vmem:[#allocation6 + $0xc0] sm:$0xff]
    %v130 = vld [vmem:[#allocation6 + $0xc8] sm:$0xff]
    %v131 = vld [vmem:[#allocation6 + $0xd0] sm:$0xff]
    %v132 = vld [vmem:[#allocation6 + $0xd8] sm:$0xff]
    %v133 = vld [vmem:[#allocation6 + $0xe0] sm:$0xff]
    %v134 = vld [vmem:[#allocation6 + $0xe8] sm:$0xff]
    %v135 = vld [vmem:[#allocation6 + $0xf0] sm:$0xff]
    %v136 = vld [vmem:[#allocation6 + $0xf8] sm:$0xff]
    %v169 = vunpack.c.l.b16 %v105
    %v170 = vunpack.c.h.b16 %v105
    %v171 = vunpack.c.l.b16 %v106
    %v172 = vunpack.c.h.b16 %v106
    %v173 = vunpack.c.l.b16 %v107
    %v174 = vunpack.c.h.b16 %v107
    %v175 = vunpack.c.l.b16 %v108
    %v176 = vunpack.c.h.b16 %v108
    %v177 = vunpack.c.l.b16 %v109
    %v178 = vunpack.c.h.b16 %v109
    %v179 = vunpack.c.l.b16 %v110
    %v180 = vunpack.c.h.b16 %v110
    %v181 = vunpack.c.l.b16 %v111
    %v182 = vunpack.c.h.b16 %v111
    %v183 = vunpack.c.l.b16 %v112
    %v184 = vunpack.c.h.b16 %v112
    %v185 = vunpack.c.l.b16 %v113
    %v186 = vunpack.c.h.b16 %v113
    %v187 = vunpack.c.l.b16 %v114
    %v188 = vunpack.c.h.b16 %v114
    %v189 = vunpack.c.l.b16 %v115
    %v190 = vunpack.c.h.b16 %v115
    %v191 = vunpack.c.l.b16 %v116
    %v192 = vunpack.c.h.b16 %v116
    %v193 = vunpack.c.l.b16 %v117
    %v194 = vunpack.c.h.b16 %v117
    %v195 = vunpack.c.l.b16 %v118
    %v196 = vunpack.c.h.b16 %v118
    %v197 = vunpack.c.l.b16 %v119
    %v198 = vunpack.c.h.b16 %v119
    %v199 = vunpack.c.l.b16 %v120
    %v200 = vunpack.c.h.b16 %v120
    %v201 = vunpack.c.l.b16 %v121
    %v202 = vunpack.c.h.b16 %v121
    %v203 = vunpack.c.l.b16 %v122
    %v204 = vunpack.c.h.b16 %v122
    %v205 = vunpack.c.l.b16 %v123
    %v206 = vunpack.c.h.b16 %v123
    %v207 = vunpack.c.l.b16 %v124
    %v208 = vunpack.c.h.b16 %v124
    %v209 = vunpack.c.l.b16 %v125
    %v210 = vunpack.c.h.b16 %v125
    %v211 = vunpack.c.l.b16 %v126
    %v212 = vunpack.c.h.b16 %v126
    %v213 = vunpack.c.l.b16 %v127
    %v214 = vunpack.c.h.b16 %v127
    %v215 = vunpack.c.l.b16 %v128
    %v216 = vunpack.c.h.b16 %v128
    %v217 = vunpack.c.l.b16 %v129
    %v218 = vunpack.c.h.b16 %v129
    %v219 = vunpack.c.l.b16 %v130
    %v220 = vunpack.c.h.b16 %v130
    %v221 = vunpack.c.l.b16 %v131
    %v222 = vunpack.c.h.b16 %v131
    %v223 = vunpack.c.l.b16 %v132
    %v224 = vunpack.c.h.b16 %v132
    %v225 = vunpack.c.l.b16 %v133
    %v226 = vunpack.c.h.b16 %v133
    %v227 = vunpack.c.l.b16 %v134
    %v228 = vunpack.c.h.b16 %v134
    %v229 = vunpack.c.l.b16 %v135
    %v230 = vunpack.c.h.b16 %v135
    %v231 = vunpack.c.l.b16 %v136
    %v232 = vunpack.c.h.b16 %v136
    %v233 = vpack.c.b16 %v173, %v169
    %v234 = vpack.c.b16 %v174, %v170
    %v235 = vpack.c.b16 %v175, %v171
    %v236 = vpack.c.b16 %v176, %v172
    %v237 = vpack.c.b16 %v181, %v177
    %v238 = vpack.c.b16 %v182, %v178
    %v239 = vpack.c.b16 %v183, %v179
    %v240 = vpack.c.b16 %v184, %v180
    %v241 = vpack.c.b16 %v189, %v185
    %v242 = vpack.c.b16 %v190, %v186
    %v243 = vpack.c.b16 %v191, %v187
    %v244 = vpack.c.b16 %v192, %v188
    %v245 = vpack.c.b16 %v197, %v193
    %v246 = vpack.c.b16 %v198, %v194
    %v247 = vpack.c.b16 %v199, %v195
    %v248 = vpack.c.b16 %v200, %v196
    %v249 = vpack.c.b16 %v205, %v201
    %v250 = vpack.c.b16 %v206, %v202
    %v251 = vpack.c.b16 %v207, %v203
    %v252 = vpack.c.b16 %v208, %v204
    %v253 = vpack.c.b16 %v213, %v209
    %v254 = vpack.c.b16 %v214, %v210
    %v255 = vpack.c.b16 %v215, %v211
    %v256 = vpack.c.b16 %v216, %v212
    %v257 = vpack.c.b16 %v221, %v217
    %v258 = vpack.c.b16 %v222, %v218
    %v259 = vpack.c.b16 %v223, %v219
    %v260 = vpack.c.b16 %v224, %v220
    %v261 = vpack.c.b16 %v229, %v225
    %v262 = vpack.c.b16 %v230, %v226
    %v263 = vpack.c.b16 %v231, %v227
    %v264 = vpack.c.b16 %v232, %v228
    %297 = vmatprep.subr.bf16.mxu0 %v262
    %298 = vmatpush1.bf16.msra.mxu0 %v261
    %299 = vmatprep.subr.bf16.mxu0 %v258
    %300 = vmatpush1.bf16.msra.mxu0 %v257
    %301 = vmatprep.subr.bf16.mxu0 %v254
    %302 = vmatpush1.bf16.msra.mxu0 %v253
    %303 = vmatprep.subr.bf16.mxu0 %v250
    %304 = vmatpush1.bf16.msra.mxu0 %v249
    %305 = vmatprep.subr.bf16.mxu0 %v246
    %306 = vmatpush1.bf16.msra.mxu0 %v245
    %307 = vmatprep.subr.bf16.mxu0 %v242
    %308 = vmatpush1.bf16.msra.mxu0 %v241
    %309 = vmatprep.subr.bf16.mxu0 %v238
    %310 = vmatpush1.bf16.msra.mxu0 %v237
    %311 = vmatprep.subr.bf16.mxu0 %v234
    %312 = vmatpush1.bf16.msra.mxu0 %v233
    %313 = vmatprep.subr.bf16.mxu0 0
    %314 = vmatpush2.bf16.msra.mxu0 0
    %315 = vmatprep.subr.bf16.mxu0 0
    %316 = vmatpush2.bf16.msra.mxu0 0
    %317 = vmatprep.subr.bf16.mxu0 0
    %318 = vmatpush2.bf16.msra.mxu0 0
    %319 = vmatprep.subr.bf16.mxu0 0
    %320 = vmatpush2.bf16.msra.mxu0 0
    %321 = vmatprep.subr.bf16.mxu0 0
    %322 = vmatpush2.bf16.msra.mxu0 0
    %323 = vmatprep.subr.bf16.mxu0 0
    %324 = vmatpush2.bf16.msra.mxu0 0
    %325 = vmatprep.subr.bf16.mxu0 0
    %326 = vmatpush2.bf16.msra.mxu0 0
    %327 = vmatprep.subr.bf16.mxu0 0
    %328 = vmatpush2.bf16.msra.mxu0 0
    %329 = vmatprep.mubr.bf16.mxu0 0
    %330 = vmatmul.mubr.bf16.gmra.mxu0 %v100
    %v331 = vpop.f32.mrf.mxu0
    %v332 = vadd.f32 0.0, %v331
    %v333 = vpop.f32.mrf.mxu0
    %v334 = vadd.f32 0.0, %v333
    %v335 = vpop.f32.mrf.mxu0
    %v336 = vpop.f32.mrf.mxu0
    %337 = vdwg.mxu0
    %338 = vmatprep.subr.bf16.mxu0 %v264
    %339 = vmatpush1.bf16.msra.mxu0 %v263
    %340 = vmatprep.subr.bf16.mxu0 %v260
    %341 = vmatpush1.bf16.msra.mxu0 %v259
    %342 = vmatprep.subr.bf16.mxu0 %v256
    %343 = vmatpush1.bf16.msra.mxu0 %v255
    %344 = vmatprep.subr.bf16.mxu0 %v252
    %345 = vmatpush1.bf16.msra.mxu0 %v251
    %346 = vmatprep.subr.bf16.mxu0 %v248
    %347 = vmatpush1.bf16.msra.mxu0 %v247
    %348 = vmatprep.subr.bf16.mxu0 %v244
    %349 = vmatpush1.bf16.msra.mxu0 %v243
    %350 = vmatprep.subr.bf16.mxu0 %v240
    %351 = vmatpush1.bf16.msra.mxu0 %v239
    %352 = vmatprep.subr.bf16.mxu0 %v236
    %353 = vmatpush1.bf16.msra.mxu0 %v235
    %354 = vmatprep.subr.bf16.mxu0 0
    %355 = vmatpush2.bf16.msra.mxu0 0
    %356 = vmatprep.subr.bf16.mxu0 0
    %357 = vmatpush2.bf16.msra.mxu0 0
    %358 = vmatprep.subr.bf16.mxu0 0
    %359 = vmatpush2.bf16.msra.mxu0 0
    %360 = vmatprep.subr.bf16.mxu0 0
    %361 = vmatpush2.bf16.msra.mxu0 0
    %362 = vmatprep.subr.bf16.mxu0 0
    %363 = vmatpush2.bf16.msra.mxu0 0
    %364 = vmatprep.subr.bf16.mxu0 0
    %365 = vmatpush2.bf16.msra.mxu0 0
    %366 = vmatprep.subr.bf16.mxu0 0
    %367 = vmatpush2.bf16.msra.mxu0 0
    %368 = vmatprep.subr.bf16.mxu0 0
    %369 = vmatpush2.bf16.msra.mxu0 0
    %370 = vmatprep.mubr.bf16.mxu0 0
    %371 = vmatmul.mubr.bf16.gmra.mxu0 %v100
    %v372 = vpop.f32.mrf.mxu0
    %v373 = vadd.f32 0.0, %v372
    %v374 = vpop.f32.mrf.mxu0
    %v375 = vadd.f32 0.0, %v374
    %v376 = vpop.f32.mrf.mxu0
    %v377 = vpop.f32.mrf.mxu0
    %378 = vdwg.mxu0
    %v379 = vadd.f32 %v101, %v332
    %v380 = vadd.f32 %v102, %v334
    %v381 = vadd.f32 %v103, %v373
    %v382 = vadd.f32 %v104, %v375
    %383 = vst [vmem:[#allocation2] sm:$0xff] %v379
    %384 = vst [vmem:[#allocation2 + $0x8] sm:$0xff] %v380
    %385 = vst [vmem:[#allocation2 + $0x10] sm:$0xff] %v381
    %386 = vst [vmem:[#allocation2 + $0x18] sm:$0xff] %v382
    // Predicated region
    $region54: #{tpu_custom_call.1} parent=1 // pred_check
      %p387 = pneg %p92
    $region55: #{tpu_custom_call.1} parent=1 // pred_check_branch
      %389 = sbr.rel (%p387) target = $region57
    $region56: #{tpu_custom_call.1} parent=1 // pred_region
      %v390 = vld [vmem:[#allocation2] sm:$0xff]
      %v391 = vld [vmem:[#allocation2 + $0x8] sm:$0xff]
      %v392 = vld [vmem:[#allocation2 + $0x10] sm:$0xff]
      %v393 = vld [vmem:[#allocation2 + $0x18] sm:$0xff]
      %v394 = vld [vmem:[#allocation8] sm:$0xf]
      %v396 = vlaneseq
      %v397 = vshrl.u32 %v396, 7
      %v398 = vsub.s32 0, %v397
      %v399 = vrot.slane %v394, %v398
      %v400 = vlaneseq
      %v401 = vshrl.u32 %v400, 7
      %v402 = vsub.s32 1, %v401
      %v403 = vrot.slane %v394, %v402
      %v404 = vlaneseq
      %v405 = vshrl.u32 %v404, 7
      %v406 = vsub.s32 2, %v405
      %v407 = vrot.slane %v394, %v406
      %v408 = vlaneseq
      %v409 = vshrl.u32 %v408, 7
      %v410 = vsub.s32 3, %v409
      %v411 = vrot.slane %v394, %v410
      %v416 = vadd.f32 %v390, %v399
      %v417 = vadd.f32 %v391, %v403
      %v418 = vadd.f32 %v392, %v407
      %v419 = vadd.f32 %v393, %v411
      %v420 = vmax.f32 %v416, 0.0
      %v421 = vmax.f32 %v417, 0.0
      %v422 = vmax.f32 %v418, 0.0
      %v423 = vmax.f32 %v419, 0.0
      %v424 = vpack.c.bf16 %v420, %v420
      %v425 = vpack.c.bf16 %v421, %v421
      %v426 = vpack.c.bf16 %v422, %v422
      %v427 = vpack.c.bf16 %v423, %v423
      %v428 = vld [vmem:[#allocation9] sm:$0xff]
      %v429 = vld [vmem:[#allocation9 + $0x8] sm:$0xff]
      %v430 = vld [vmem:[#allocation9 + $0x10] sm:$0xff]
      %v431 = vld [vmem:[#allocation9 + $0x18] sm:$0xff]
      %v432 = vld [vmem:[#allocation9 + $0x20] sm:$0xff]
      %v433 = vld [vmem:[#allocation9 + $0x28] sm:$0xff]
      %v434 = vld [vmem:[#allocation9 + $0x30] sm:$0xff]
      %v435 = vld [vmem:[#allocation9 + $0x38] sm:$0xff]
      %v436 = vld [vmem:[#allocation9 + $0x40] sm:$0xff]
      %v437 = vld [vmem:[#allocation9 + $0x48] sm:$0xff]
      %v438 = vld [vmem:[#allocation9 + $0x50] sm:$0xff]
      %v439 = vld [vmem:[#allocation9 + $0x58] sm:$0xff]
      %v440 = vld [vmem:[#allocation9 + $0x60] sm:$0xff]
      %v441 = vld [vmem:[#allocation9 + $0x68] sm:$0xff]
      %v442 = vld [vmem:[#allocation9 + $0x70] sm:$0xff]
      %v443 = vld [vmem:[#allocation9 + $0x78] sm:$0xff]
      %v444 = vld [vmem:[#allocation9 + $0x80] sm:$0xff]
      %v445 = vld [vmem:[#allocation9 + $0x88] sm:$0xff]
      %v446 = vld [vmem:[#allocation9 + $0x90] sm:$0xff]
      %v447 = vld [vmem:[#allocation9 + $0x98] sm:$0xff]
      %v448 = vld [vmem:[#allocation9 + $0xa0] sm:$0xff]
      %v449 = vld [vmem:[#allocation9 + $0xa8] sm:$0xff]
      %v450 = vld [vmem:[#allocation9 + $0xb0] sm:$0xff]
      %v451 = vld [vmem:[#allocation9 + $0xb8] sm:$0xff]
      %v452 = vld [vmem:[#allocation9 + $0xc0] sm:$0xff]
      %v453 = vld [vmem:[#allocation9 + $0xc8] sm:$0xff]
      %v454 = vld [vmem:[#allocation9 + $0xd0] sm:$0xff]
      %v455 = vld [vmem:[#allocation9 + $0xd8] sm:$0xff]
      %v456 = vld [vmem:[#allocation9 + $0xe0] sm:$0xff]
      %v457 = vld [vmem:[#allocation9 + $0xe8] sm:$0xff]
      %v458 = vld [vmem:[#allocation9 + $0xf0] sm:$0xff]
      %v459 = vld [vmem:[#allocation9 + $0xf8] sm:$0xff]
      %v460 = vld [vmem:[#allocation9 + $0x100] sm:$0xff]
      %v461 = vld [vmem:[#allocation9 + $0x108] sm:$0xff]
      %v462 = vld [vmem:[#allocation9 + $0x110] sm:$0xff]
      %v463 = vld [vmem:[#allocation9 + $0x118] sm:$0xff]
      %v464 = vld [vmem:[#allocation9 + $0x120] sm:$0xff]
      %v465 = vld [vmem:[#allocation9 + $0x128] sm:$0xff]
      %v466 = vld [vmem:[#allocation9 + $0x130] sm:$0xff]
      %v467 = vld [vmem:[#allocation9 + $0x138] sm:$0xff]
      %v468 = vld [vmem:[#allocation9 + $0x140] sm:$0xff]
      %v469 = vld [vmem:[#allocation9 + $0x148] sm:$0xff]
      %v470 = vld [vmem:[#allocation9 + $0x150] sm:$0xff]
      %v471 = vld [vmem:[#allocation9 + $0x158] sm:$0xff]
      %v472 = vld [vmem:[#allocation9 + $0x160] sm:$0xff]
      %v473 = vld [vmem:[#allocation9 + $0x168] sm:$0xff]
      %v474 = vld [vmem:[#allocation9 + $0x170] sm:$0xff]
      %v475 = vld [vmem:[#allocation9 + $0x178] sm:$0xff]
      %v476 = vld [vmem:[#allocation9 + $0x180] sm:$0xff]
      %v477 = vld [vmem:[#allocation9 + $0x188] sm:$0xff]
      %v478 = vld [vmem:[#allocation9 + $0x190] sm:$0xff]
      %v479 = vld [vmem:[#allocation9 + $0x198] sm:$0xff]
      %v480 = vld [vmem:[#allocation9 + $0x1a0] sm:$0xff]
      %v481 = vld [vmem:[#allocation9 + $0x1a8] sm:$0xff]
      %v482 = vld [vmem:[#allocation9 + $0x1b0] sm:$0xff]
      %v483 = vld [vmem:[#allocation9 + $0x1b8] sm:$0xff]
      %v484 = vld [vmem:[#allocation9 + $0x1c0] sm:$0xff]
      %v485 = vld [vmem:[#allocation9 + $0x1c8] sm:$0xff]
      %v486 = vld [vmem:[#allocation9 + $0x1d0] sm:$0xff]
      %v487 = vld [vmem:[#allocation9 + $0x1d8] sm:$0xff]
      %v488 = vld [vmem:[#allocation9 + $0x1e0] sm:$0xff]
      %v489 = vld [vmem:[#allocation9 + $0x1e8] sm:$0xff]
      %v490 = vld [vmem:[#allocation9 + $0x1f0] sm:$0xff]
      %v491 = vld [vmem:[#allocation9 + $0x1f8] sm:$0xff]
      %v492 = vld [vmem:[%s4] sm:$0x3]
      %v494 = vlaneseq
      %v495 = vshrl.u32 %v494, 7
      %v496 = vsub.s32 0, %v495
      %v497 = vrot.slane %v492, %v496
      %v498 = vlaneseq
      %v499 = vshrl.u32 %v498, 7
      %v500 = vsub.s32 1, %v499
      %v501 = vrot.slane %v492, %v500
      %v568 = vunpack.c.l.b16 %v428
      %v569 = vunpack.c.h.b16 %v428
      %v570 = vunpack.c.l.b16 %v429
      %v571 = vunpack.c.h.b16 %v429
      %v572 = vunpack.c.l.b16 %v430
      %v573 = vunpack.c.h.b16 %v430
      %v574 = vunpack.c.l.b16 %v431
      %v575 = vunpack.c.h.b16 %v431
      %v576 = vunpack.c.l.b16 %v432
      %v577 = vunpack.c.h.b16 %v432
      %v578 = vunpack.c.l.b16 %v433
      %v579 = vunpack.c.h.b16 %v433
      %v580 = vunpack.c.l.b16 %v434
      %v581 = vunpack.c.h.b16 %v434
      %v582 = vunpack.c.l.b16 %v435
      %v583 = vunpack.c.h.b16 %v435
      %v584 = vunpack.c.l.b16 %v436
      %v585 = vunpack.c.h.b16 %v436
      %v586 = vunpack.c.l.b16 %v437
      %v587 = vunpack.c.h.b16 %v437
      %v588 = vunpack.c.l.b16 %v438
      %v589 = vunpack.c.h.b16 %v438
      %v590 = vunpack.c.l.b16 %v439
      %v591 = vunpack.c.h.b16 %v439
      %v592 = vunpack.c.l.b16 %v440
      %v593 = vunpack.c.h.b16 %v440
      %v594 = vunpack.c.l.b16 %v441
      %v595 = vunpack.c.h.b16 %v441
      %v596 = vunpack.c.l.b16 %v442
      %v597 = vunpack.c.h.b16 %v442
      %v598 = vunpack.c.l.b16 %v443
      %v599 = vunpack.c.h.b16 %v443
      %v600 = vunpack.c.l.b16 %v444
      %v601 = vunpack.c.h.b16 %v444
      %v602 = vunpack.c.l.b16 %v445
      %v603 = vunpack.c.h.b16 %v445
      %v604 = vunpack.c.l.b16 %v446
      %v605 = vunpack.c.h.b16 %v446
      %v606 = vunpack.c.l.b16 %v447
      %v607 = vunpack.c.h.b16 %v447
      %v608 = vunpack.c.l.b16 %v448
      %v609 = vunpack.c.h.b16 %v448
      %v610 = vunpack.c.l.b16 %v449
      %v611 = vunpack.c.h.b16 %v449
      %v612 = vunpack.c.l.b16 %v450
      %v613 = vunpack.c.h.b16 %v450
      %v614 = vunpack.c.l.b16 %v451
      %v615 = vunpack.c.h.b16 %v451
      %v616 = vunpack.c.l.b16 %v452
      %v617 = vunpack.c.h.b16 %v452
      %v618 = vunpack.c.l.b16 %v453
      %v619 = vunpack.c.h.b16 %v453
      %v620 = vunpack.c.l.b16 %v454
      %v621 = vunpack.c.h.b16 %v454
      %v622 = vunpack.c.l.b16 %v455
      %v623 = vunpack.c.h.b16 %v455
      %v624 = vunpack.c.l.b16 %v456
      %v625 = vunpack.c.h.b16 %v456
      %v626 = vunpack.c.l.b16 %v457
      %v627 = vunpack.c.h.b16 %v457
      %v628 = vunpack.c.l.b16 %v458
      %v629 = vunpack.c.h.b16 %v458
      %v630 = vunpack.c.l.b16 %v459
      %v631 = vunpack.c.h.b16 %v459
      %v632 = vunpack.c.l.b16 %v460
      %v633 = vunpack.c.h.b16 %v460
      %v634 = vunpack.c.l.b16 %v461
      %v635 = vunpack.c.h.b16 %v461
      %v636 = vunpack.c.l.b16 %v462
      %v637 = vunpack.c.h.b16 %v462
      %v638 = vunpack.c.l.b16 %v463
      %v639 = vunpack.c.h.b16 %v463
      %v640 = vunpack.c.l.b16 %v464
      %v641 = vunpack.c.h.b16 %v464
      %v642 = vunpack.c.l.b16 %v465
      %v643 = vunpack.c.h.b16 %v465
      %v644 = vunpack.c.l.b16 %v466
      %v645 = vunpack.c.h.b16 %v466
      %v646 = vunpack.c.l.b16 %v467
      %v647 = vunpack.c.h.b16 %v467
      %v648 = vunpack.c.l.b16 %v468
      %v649 = vunpack.c.h.b16 %v468
      %v650 = vunpack.c.l.b16 %v469
      %v651 = vunpack.c.h.b16 %v469
      %v652 = vunpack.c.l.b16 %v470
      %v653 = vunpack.c.h.b16 %v470
      %v654 = vunpack.c.l.b16 %v471
      %v655 = vunpack.c.h.b16 %v471
      %v656 = vunpack.c.l.b16 %v472
      %v657 = vunpack.c.h.b16 %v472
      %v658 = vunpack.c.l.b16 %v473
      %v659 = vunpack.c.h.b16 %v473
      %v660 = vunpack.c.l.b16 %v474
      %v661 = vunpack.c.h.b16 %v474
      %v662 = vunpack.c.l.b16 %v475
      %v663 = vunpack.c.h.b16 %v475
      %v664 = vunpack.c.l.b16 %v476
      %v665 = vunpack.c.h.b16 %v476
      %v666 = vunpack.c.l.b16 %v477
      %v667 = vunpack.c.h.b16 %v477
      %v668 = vunpack.c.l.b16 %v478
      %v669 = vunpack.c.h.b16 %v478
      %v670 = vunpack.c.l.b16 %v479
      %v671 = vunpack.c.h.b16 %v479
      %v672 = vunpack.c.l.b16 %v480
      %v673 = vunpack.c.h.b16 %v480
      %v674 = vunpack.c.l.b16 %v481
      %v675 = vunpack.c.h.b16 %v481
      %v676 = vunpack.c.l.b16 %v482
      %v677 = vunpack.c.h.b16 %v482
      %v678 = vunpack.c.l.b16 %v483
      %v679 = vunpack.c.h.b16 %v483
      %v680 = vunpack.c.l.b16 %v484
      %v681 = vunpack.c.h.b16 %v484
      %v682 = vunpack.c.l.b16 %v485
      %v683 = vunpack.c.h.b16 %v485
      %v684 = vunpack.c.l.b16 %v486
      %v685 = vunpack.c.h.b16 %v486
      %v686 = vunpack.c.l.b16 %v487
      %v687 = vunpack.c.h.b16 %v487
      %v688 = vunpack.c.l.b16 %v488
      %v689 = vunpack.c.h.b16 %v488
      %v690 = vunpack.c.l.b16 %v489
      %v691 = vunpack.c.h.b16 %v489
      %v692 = vunpack.c.l.b16 %v490
      %v693 = vunpack.c.h.b16 %v490
      %v694 = vunpack.c.l.b16 %v491
      %v695 = vunpack.c.h.b16 %v491
      %v696 = vpack.c.b16 %v570, %v568
      %v697 = vpack.c.b16 %v571, %v569
      %v698 = vpack.c.b16 %v574, %v572
      %v699 = vpack.c.b16 %v575, %v573
      %v700 = vpack.c.b16 %v578, %v576
      %v701 = vpack.c.b16 %v579, %v577
      %v702 = vpack.c.b16 %v582, %v580
      %v703 = vpack.c.b16 %v583, %v581
      %v704 = vpack.c.b16 %v586, %v584
      %v705 = vpack.c.b16 %v587, %v585
      %v706 = vpack.c.b16 %v590, %v588
      %v707 = vpack.c.b16 %v591, %v589
      %v708 = vpack.c.b16 %v594, %v592
      %v709 = vpack.c.b16 %v595, %v593
      %v710 = vpack.c.b16 %v598, %v596
      %v711 = vpack.c.b16 %v599, %v597
      %v712 = vpack.c.b16 %v602, %v600
      %v713 = vpack.c.b16 %v603, %v601
      %v714 = vpack.c.b16 %v606, %v604
      %v715 = vpack.c.b16 %v607, %v605
      %v716 = vpack.c.b16 %v610, %v608
      %v717 = vpack.c.b16 %v611, %v609
      %v718 = vpack.c.b16 %v614, %v612
      %v719 = vpack.c.b16 %v615, %v613
      %v720 = vpack.c.b16 %v618, %v616
      %v721 = vpack.c.b16 %v619, %v617
      %v722 = vpack.c.b16 %v622, %v620
      %v723 = vpack.c.b16 %v623, %v621
      %v724 = vpack.c.b16 %v626, %v624
      %v725 = vpack.c.b16 %v627, %v625
      %v726 = vpack.c.b16 %v630, %v628
      %v727 = vpack.c.b16 %v631, %v629
      %v728 = vpack.c.b16 %v634, %v632
      %v729 = vpack.c.b16 %v635, %v633
      %v730 = vpack.c.b16 %v638, %v636
      %v731 = vpack.c.b16 %v639, %v637
      %v732 = vpack.c.b16 %v642, %v640
      %v733 = vpack.c.b16 %v643, %v641
      %v734 = vpack.c.b16 %v646, %v644
      %v735 = vpack.c.b16 %v647, %v645
      %v736 = vpack.c.b16 %v650, %v648
      %v737 = vpack.c.b16 %v651, %v649
      %v738 = vpack.c.b16 %v654, %v652
      %v739 = vpack.c.b16 %v655, %v653
      %v740 = vpack.c.b16 %v658, %v656
      %v741 = vpack.c.b16 %v659, %v657
      %v742 = vpack.c.b16 %v662, %v660
      %v743 = vpack.c.b16 %v663, %v661
      %v744 = vpack.c.b16 %v666, %v664
      %v745 = vpack.c.b16 %v667, %v665
      %v746 = vpack.c.b16 %v670, %v668
      %v747 = vpack.c.b16 %v671, %v669
      %v748 = vpack.c.b16 %v674, %v672
      %v749 = vpack.c.b16 %v675, %v673
      %v750 = vpack.c.b16 %v678, %v676
      %v751 = vpack.c.b16 %v679, %v677
      %v752 = vpack.c.b16 %v682, %v680
      %v753 = vpack.c.b16 %v683, %v681
      %v754 = vpack.c.b16 %v686, %v684
      %v755 = vpack.c.b16 %v687, %v685
      %v756 = vpack.c.b16 %v690, %v688
      %v757 = vpack.c.b16 %v691, %v689
      %v758 = vpack.c.b16 %v694, %v692
      %v759 = vpack.c.b16 %v695, %v693
      %824 = vmatprep.subr.bf16.mxu0 %v711
      %825 = vmatpush1.bf16.msra.mxu0 %v710
      %826 = vmatprep.subr.bf16.mxu0 %v709
      %827 = vmatpush1.bf16.msra.mxu0 %v708
      %828 = vmatprep.subr.bf16.mxu0 %v707
      %829 = vmatpush1.bf16.msra.mxu0 %v706
      %830 = vmatprep.subr.bf16.mxu0 %v705
      %831 = vmatpush1.bf16.msra.mxu0 %v704
      %832 = vmatprep.subr.bf16.mxu0 %v703
      %833 = vmatpush1.bf16.msra.mxu0 %v702
      %834 = vmatprep.subr.bf16.mxu0 %v701
      %835 = vmatpush1.bf16.msra.mxu0 %v700
      %836 = vmatprep.subr.bf16.mxu0 %v699
      %837 = vmatpush1.bf16.msra.mxu0 %v698
      %838 = vmatprep.subr.bf16.mxu0 %v697
      %839 = vmatpush1.bf16.msra.mxu0 %v696
      %840 = vmatprep.subr.bf16.mxu0 %v727
      %841 = vmatpush2.bf16.msra.mxu0 %v726
      %842 = vmatprep.subr.bf16.mxu0 %v725
      %843 = vmatpush2.bf16.msra.mxu0 %v724
      %844 = vmatprep.subr.bf16.mxu0 %v723
      %845 = vmatpush2.bf16.msra.mxu0 %v722
      %846 = vmatprep.subr.bf16.mxu0 %v721
      %847 = vmatpush2.bf16.msra.mxu0 %v720
      %848 = vmatprep.subr.bf16.mxu0 %v719
      %849 = vmatpush2.bf16.msra.mxu0 %v718
      %850 = vmatprep.subr.bf16.mxu0 %v717
      %851 = vmatpush2.bf16.msra.mxu0 %v716
      %852 = vmatprep.subr.bf16.mxu0 %v715
      %853 = vmatpush2.bf16.msra.mxu0 %v714
      %854 = vmatprep.subr.bf16.mxu0 %v713
      %855 = vmatpush2.bf16.msra.mxu0 %v712
      %856 = vmatprep.mubr.bf16.mxu0 %v425
      %857 = vmatmul.mubr.bf16.gmra.mxu0 %v424
      %v858 = vpop.f32.mrf.mxu0
      %v859 = vadd.f32 %v497, %v858
      %v860 = vpop.f32.mrf.mxu0
      %v861 = vadd.f32 %v501, %v860
      %v862 = vpop.f32.mrf.mxu0
      %v863 = vpop.f32.mrf.mxu0
      %864 = vdwg.mxu0
      %865 = vmatprep.subr.bf16.mxu0 %v743
      %866 = vmatpush1.bf16.msra.mxu0 %v742
      %867 = vmatprep.subr.bf16.mxu0 %v741
      %868 = vmatpush1.bf16.msra.mxu0 %v740
      %869 = vmatprep.subr.bf16.mxu0 %v739
      %870 = vmatpush1.bf16.msra.mxu0 %v738
      %871 = vmatprep.subr.bf16.mxu0 %v737
      %872 = vmatpush1.bf16.msra.mxu0 %v736
      %873 = vmatprep.subr.bf16.mxu0 %v735
      %874 = vmatpush1.bf16.msra.mxu0 %v734
      %875 = vmatprep.subr.bf16.mxu0 %v733
      %876 = vmatpush1.bf16.msra.mxu0 %v732
      %877 = vmatprep.subr.bf16.mxu0 %v731
      %878 = vmatpush1.bf16.msra.mxu0 %v730
      %879 = vmatprep.subr.bf16.mxu0 %v729
      %880 = vmatpush1.bf16.msra.mxu0 %v728
      %881 = vmatprep.subr.bf16.mxu0 %v759
      %882 = vmatpush2.bf16.msra.mxu0 %v758
      %883 = vmatprep.subr.bf16.mxu0 %v757
      %884 = vmatpush2.bf16.msra.mxu0 %v756
      %885 = vmatprep.subr.bf16.mxu0 %v755
      %886 = vmatpush2.bf16.msra.mxu0 %v754
      %887 = vmatprep.subr.bf16.mxu0 %v753
      %888 = vmatpush2.bf16.msra.mxu0 %v752
      %889 = vmatprep.subr.bf16.mxu0 %v751
      %890 = vmatpush2.bf16.msra.mxu0 %v750
      %891 = vmatprep.subr.bf16.mxu0 %v749
      %892 = vmatpush2.bf16.msra.mxu0 %v748
      %893 = vmatprep.subr.bf16.mxu0 %v747
      %894 = vmatpush2.bf16.msra.mxu0 %v746
      %895 = vmatprep.subr.bf16.mxu0 %v745
      %896 = vmatpush2.bf16.msra.mxu0 %v744
      %897 = vmatprep.mubr.bf16.mxu0 %v427
      %898 = vmatmul.mubr.bf16.gmra.mxu0 %v426
      %v899 = vpop.f32.mrf.mxu0
      %v900 = vadd.f32 %v859, %v899
      %v901 = vpop.f32.mrf.mxu0
      %v902 = vadd.f32 %v861, %v901
      %v903 = vpop.f32.mrf.mxu0
      %v904 = vpop.f32.mrf.mxu0
      %905 = vdwg.mxu0
      %v906 = vmax.f32 %v900, 0.0
      %v907 = vmax.f32 %v902, 0.0
      %v908 = vpack.c.bf16 %v906, %v906
      %v909 = vpack.c.bf16 %v907, %v907
      %v910 = vld [vmem:[#allocation11] sm:$0xf]
      %v911 = vld [vmem:[#allocation11 + $0x4] sm:$0xf]
      %v912 = vld [vmem:[#allocation11 + $0x8] sm:$0xf]
      %v913 = vld [vmem:[#allocation11 + $0xc] sm:$0xf]
      %v914 = vld [vmem:[#allocation11 + $0x10] sm:$0xf]
      %v915 = vld [vmem:[#allocation11 + $0x14] sm:$0xf]
      %v916 = vld [vmem:[#allocation11 + $0x18] sm:$0xf]
      %v917 = vld [vmem:[#allocation11 + $0x1c] sm:$0xf]
      %v918 = vld [vmem:[#allocation11 + $0x20] sm:$0xf]
      %v919 = vld [vmem:[#allocation11 + $0x24] sm:$0xf]
      %v920 = vld [vmem:[#allocation11 + $0x28] sm:$0xf]
      %v921 = vld [vmem:[#allocation11 + $0x2c] sm:$0xf]
      %v922 = vld [vmem:[#allocation11 + $0x30] sm:$0xf]
      %v923 = vld [vmem:[#allocation11 + $0x34] sm:$0xf]
      %v924 = vld [vmem:[#allocation11 + $0x38] sm:$0xf]
      %v925 = vld [vmem:[#allocation11 + $0x3c] sm:$0xf]
      %v926 = vld [vmem:[#allocation11 + $0x40] sm:$0xf]
      %v927 = vld [vmem:[#allocation11 + $0x44] sm:$0xf]
      %v928 = vld [vmem:[#allocation11 + $0x48] sm:$0xf]
      %v929 = vld [vmem:[#allocation11 + $0x4c] sm:$0xf]
      %v930 = vld [vmem:[#allocation11 + $0x50] sm:$0xf]
      %v931 = vld [vmem:[#allocation11 + $0x54] sm:$0xf]
      %v932 = vld [vmem:[#allocation11 + $0x58] sm:$0xf]
      %v933 = vld [vmem:[#allocation11 + $0x5c] sm:$0xf]
      %v934 = vld [vmem:[#allocation11 + $0x60] sm:$0xf]
      %v935 = vld [vmem:[#allocation11 + $0x64] sm:$0xf]
      %v936 = vld [vmem:[#allocation11 + $0x68] sm:$0xf]
      %v937 = vld [vmem:[#allocation11 + $0x6c] sm:$0xf]
      %v938 = vld [vmem:[#allocation11 + $0x70] sm:$0xf]
      %v939 = vld [vmem:[#allocation11 + $0x74] sm:$0xf]
      %v940 = vld [vmem:[#allocation11 + $0x78] sm:$0xf]
      %v941 = vld [vmem:[#allocation11 + $0x7c] sm:$0xf]
      %v942 = vld [vmem:[%s6] sm:$0x1]
      %v944 = vlaneseq
      %v945 = vshrl.u32 %v944, 7
      %v946 = vsub.s32 0, %v945
      %v947 = vrot.slane %v942, %v946
      %v981 = vunpack.c.l.b16 %v910
      %v982 = vunpack.c.l.b16 %v911
      %v983 = vunpack.c.l.b16 %v912
      %v984 = vunpack.c.l.b16 %v913
      %v985 = vunpack.c.l.b16 %v914
      %v986 = vunpack.c.l.b16 %v915
      %v987 = vunpack.c.l.b16 %v916
      %v988 = vunpack.c.l.b16 %v917
      %v989 = vunpack.c.l.b16 %v918
      %v990 = vunpack.c.l.b16 %v919
      %v991 = vunpack.c.l.b16 %v920
      %v992 = vunpack.c.l.b16 %v921
      %v993 = vunpack.c.l.b16 %v922
      %v994 = vunpack.c.l.b16 %v923
      %v995 = vunpack.c.l.b16 %v924
      %v996 = vunpack.c.l.b16 %v925
      %v997 = vunpack.c.l.b16 %v926
      %v998 = vunpack.c.l.b16 %v927
      %v999 = vunpack.c.l.b16 %v928
      %v1000 = vunpack.c.l.b16 %v929
      %v1001 = vunpack.c.l.b16 %v930
      %v1002 = vunpack.c.l.b16 %v931
      %v1003 = vunpack.c.l.b16 %v932
      %v1004 = vunpack.c.l.b16 %v933
      %v1005 = vunpack.c.l.b16 %v934
      %v1006 = vunpack.c.l.b16 %v935
      %v1007 = vunpack.c.l.b16 %v936
      %v1008 = vunpack.c.l.b16 %v937
      %v1009 = vunpack.c.l.b16 %v938
      %v1010 = vunpack.c.l.b16 %v939
      %v1011 = vunpack.c.l.b16 %v940
      %v1012 = vunpack.c.l.b16 %v941
      %v1013 = vpack.c.b16 %v982, %v981
      %v1014 = vpack.c.b16 %v984, %v983
      %v1015 = vpack.c.b16 %v986, %v985
      %v1016 = vpack.c.b16 %v988, %v987
      %v1017 = vpack.c.b16 %v990, %v989
      %v1018 = vpack.c.b16 %v992, %v991
      %v1019 = vpack.c.b16 %v994, %v993
      %v1020 = vpack.c.b16 %v996, %v995
      %v1021 = vpack.c.b16 %v998, %v997
      %v1022 = vpack.c.b16 %v1000, %v999
      %v1023 = vpack.c.b16 %v1002, %v1001
      %v1024 = vpack.c.b16 %v1004, %v1003
      %v1025 = vpack.c.b16 %v1006, %v1005
      %v1026 = vpack.c.b16 %v1008, %v1007
      %v1027 = vpack.c.b16 %v1010, %v1009
      %v1028 = vpack.c.b16 %v1012, %v1011
      %1045 = vmatprep.subr.bf16.mxu0 0
      %1046 = vmatpush1.bf16.msra.mxu0 %v1020
      %1047 = vmatprep.subr.bf16.mxu0 0
      %1048 = vmatpush1.bf16.msra.mxu0 %v1019
      %1049 = vmatprep.subr.bf16.mxu0 0
      %1050 = vmatpush1.bf16.msra.mxu0 %v1018
      %1051 = vmatprep.subr.bf16.mxu0 0
      %1052 = vmatpush1.bf16.msra.mxu0 %v1017
      %1053 = vmatprep.subr.bf16.mxu0 0
      %1054 = vmatpush1.bf16.msra.mxu0 %v1016
      %1055 = vmatprep.subr.bf16.mxu0 0
      %1056 = vmatpush1.bf16.msra.mxu0 %v1015
      %1057 = vmatprep.subr.bf16.mxu0 0
      %1058 = vmatpush1.bf16.msra.mxu0 %v1014
      %1059 = vmatprep.subr.bf16.mxu0 0
      %1060 = vmatpush1.bf16.msra.mxu0 %v1013
      %1061 = vmatprep.subr.bf16.mxu0 0
      %1062 = vmatpush2.bf16.msra.mxu0 %v1028
      %1063 = vmatprep.subr.bf16.mxu0 0
      %1064 = vmatpush2.bf16.msra.mxu0 %v1027
      %1065 = vmatprep.subr.bf16.mxu0 0
      %1066 = vmatpush2.bf16.msra.mxu0 %v1026
      %1067 = vmatprep.subr.bf16.mxu0 0
      %1068 = vmatpush2.bf16.msra.mxu0 %v1025
      %1069 = vmatprep.subr.bf16.mxu0 0
      %1070 = vmatpush2.bf16.msra.mxu0 %v1024
      %1071 = vmatprep.subr.bf16.mxu0 0
      %1072 = vmatpush2.bf16.msra.mxu0 %v1023
      %1073 = vmatprep.subr.bf16.mxu0 0
      %1074 = vmatpush2.bf16.msra.mxu0 %v1022
      %1075 = vmatprep.subr.bf16.mxu0 0
      %1076 = vmatpush2.bf16.msra.mxu0 %v1021
      %1077 = vmatprep.mubr.bf16.mxu0 %v909
      %1078 = vmatmul.mubr.bf16.gmra.mxu0 %v908
      %v1079 = vpop.f32.mrf.mxu0
      %v1080 = vadd.f32 %v947, %v1079
      %v1081 = vpop.f32.mrf.mxu0
      %v1082 = vpop.f32.mrf.mxu0
      %v1083 = vpop.f32.mrf.mxu0
      %1084 = vdwg.mxu0
      %1085 = vst [vmem:[#allocation12] sm:$0xff] %v1080
    $region57: #{tpu_custom_call.1} parent=1 // pred_fallthru
      _
    // Predicated region
    $region58: #{tpu_custom_call.1} parent=1 // pred_check
      _
    $region59: #{tpu_custom_call.1} parent=1 // pred_check_branch
      %1087 = sbr.rel (0) target = $region61
    $region60: #{tpu_custom_call.1} parent=1 // pred_region
      %s1089 = ssub.s32 128, 128
      %1090 = vsyncadd [#allocation5], %s1089
      %s1092 = sshll.u32 [#allocation12], 4
      %s1093 = int_to_ptr.vmem [resolvable:$true] %s1092
      %1095 = dma.vmem_to_hbm [thread:$0]  %s1093, 128, %s7, [#allocation5]
    $region61: #{tpu_custom_call.1} parent=1 // pred_fallthru
      _
    // Predicated region
    $region62: #{tpu_custom_call.1} parent=1 // pred_check
      _
    $region63: #{tpu_custom_call.1} parent=1 // pred_check_branch
      %1097 = sbr.rel (0) target = $region65
    $region64: #{tpu_custom_call.1} parent=1 // pred_region
      %1098 = dma.done [#allocation5], 128
    $region65: #{tpu_custom_call.1} parent=1 // pred_fallthru
      _
    %1099 = vsyncpa [#allocation4], 1
    %1100 = vsyncpa [#allocation7], 1
    %1101 = vsyncpa [#allocation10], 1
    %1102 = vsyncpa [#allocation5], 1

// kernel: tpu_custom_call.1
$region0: #{tpu_custom_call.1}
  #allocation0 [shape = 'u32[]', space=smem, size = 0x4, offset = 0x4, fixed_abs, tag = 'smem constant byte address 0x4 - core index']
  #allocation1 [shape = 'u32[144,128]{1,0:T(1,128)}', space=vmem, size = 0x12000, scoped, tag = 'internal scratch']
  #allocation2 [shape = 'f32[8,512]{1,0:T(8,128)}', space=vmem, size = 0x4000, scoped, tag = 'scratch operand']
  %s0 = inlined_call_operand.hbm [shape: bf16[8,128], index: 0, kind: input, shape index: {}]
  %s1 = inlined_call_operand.hbm [shape: bf16[128,512], index: 1, kind: input, shape index: {}]
  %s2 = inlined_call_operand.hbm [shape: f32[1,512], index: 2, kind: input, shape index: {}]
  %s3 = inlined_call_operand.hbm [shape: bf16[512,256], index: 3, kind: input, shape index: {}]
  %s4 = inlined_call_operand.vmem [shape: f32[1,256], index: 4, kind: input, shape index: {}]
  %s5 = inlined_call_operand.hbm [shape: bf16[256,128], index: 5, kind: input, shape index: {}]
  %s6 = inlined_call_operand.vmem [shape: f32[1,128], index: 6, kind: input, shape index: {}]
  %s7 = inlined_call_operand.hbm [shape: f32[8,128], index: 7, kind: output, shape index: {}]
  %s8 = sld [smem:[#allocation0]]
  $region66: #{tpu_custom_call.1} parent=0
    _
  %s10 = ssub.s32 1, %s8
  %s11 = scalar_select 0, %s10, %s8
  $region1: #{tpu_custom_call.1} parent=0
    #allocation3 [shape = 'u8[2048]{0}', space=vmem, size = 0x800, scoped, tag = 'input window, operand 0, single buffered']
    #allocation4 [shape = 's32[1]{0}', space=sflag, size = 0x4, scoped, tag = 'scoped memory for tpu_custom_call.1']
    #allocation5 [shape = 's32[1]{0}', space=sflag, size = 0x4, scoped, tag = 'scoped memory for tpu_custom_call.1']
    #allocation6 [shape = 'u8[131072]{0}', space=vmem, size = 0x20000, scoped, tag = 'input window, operand 1, single buffered']
    #allocation7 [shape = 's32[1]{0}', space=sflag, size = 0x4, scoped, tag = 'scoped memory for tpu_custom_call.1']
    #allocation8 [shape = 'u8[2048]{0}', space=vmem, size = 0x800, scoped, tag = 'input window, operand 2, single buffered']
    #allocation9 [shape = 'u8[262144]{0}', space=vmem, size = 0x40000, scoped, tag = 'input window, operand 3, single buffered']
    #allocation10 [shape = 's32[1]{0}', space=sflag, size = 0x4, scoped, tag = 'scoped memory for tpu_custom_call.1']
    #allocation11 [shape = 'u8[65536]{0}', space=vmem, size = 0x10000, scoped, tag = 'input window, operand 5, single buffered']
    #allocation12 [shape = 'u8[4096]{0}', space=vmem, size = 0x1000, scoped, tag = 'output window, operand 0, single buffered']
    %12 = vsyncpa [#allocation4], 0
    %13 = vsyncpa [#allocation7], 0
    %14 = vsyncpa [#allocation10], 0
    %15 = vsyncpa [#allocation5], 0
    // Predicated region
    $region2: #{tpu_custom_call.1} parent=1 // pred_check
      _
    $region3: #{tpu_custom_call.1} parent=1 // pred_check_branch
      %17 = sbr.rel (0) target = $region5
    $region4: #{tpu_custom_call.1} parent=1 // pred_region
      %s19 = ssub.s32 64, 64
      %20 = vsyncadd [#allocation4], %s19
      %s22 = sshll.u32 [#allocation3], 4
      %s23 = int_to_ptr.vmem [resolvable:$true] %s22
      %25 = dma.hbm_to_vmem [thread:$0]  %s0, 64, %s23, [#allocation4]
    $region5: #{tpu_custom_call.1} parent=1 // pred_fallthru
      _
    // Predicated region
    $region6: #{tpu_custom_call.1} parent=1 // pred_check
      _
    $region7: #{tpu_custom_call.1} parent=1 // pred_check_branch
      %27 = sbr.rel (0) target = $region9
    $region8: #{tpu_custom_call.1} parent=1 // pred_region
      %s29 = ssub.s32 4096, 4096
      %30 = vsyncadd [#allocation7], %s29
      %s31 = sshll.u32 [#allocation6], 4
      %s32 = int_to_ptr.vmem [resolvable:$true] %s31
      %37 = dma.hbm_to_vmem [thread:$0]  %s1, 4096, %s32, [#allocation7], 256, 256, 16
    $region9: #{tpu_custom_call.1} parent=1 // pred_fallthru
      _
    // Predicated region
    $region10: #{tpu_custom_call.1} parent=1 // pred_check
      _
    $region11: #{tpu_custom_call.1} parent=1 // pred_check_branch
      %39 = sbr.rel (0) target = $region13
    $region12: #{tpu_custom_call.1} parent=1 // pred_region
      %s41 = ssub.s32 64, 64
      %42 = vsyncadd [#allocation7], %s41
      %s44 = sshll.u32 [#allocation8], 4
      %s45 = int_to_ptr.vmem [resolvable:$true] %s44
      %47 = dma.hbm_to_vmem [thread:$0]  %s2, 64, %s45, [#allocation7]
    $region13: #{tpu_custom_call.1} parent=1 // pred_fallthru
      _
    // Predicated region
    $region14: #{tpu_custom_call.1} parent=1 // pred_check
      _
    $region15: #{tpu_custom_call.1} parent=1 // pred_check_branch
      %49 = sbr.rel (0) target = $region17
    $region16: #{tpu_custom_call.1} parent=1 // pred_region
      %s51 = ssub.s32 8192, 8192
      %52 = vsyncadd [#allocation10], %s51
      %s53 = sshll.u32 [#allocation9], 4
      %s54 = int_to_ptr.vmem [resolvable:$true] %s53
      %59 = dma.hbm_to_vmem [thread:$0]  %s3, 8192, %s54, [#allocation10], 128, 128, 8
    $region17: #{tpu_custom_call.1} parent=1 // pred_fallthru
      _
    // Predicated region
    $region18: #{tpu_custom_call.1} parent=1 // pred_check
      _
    $region19: #{tpu_custom_call.1} parent=1 // pred_check_branch
      %61 = sbr.rel (0) target = $region21
    $region20: #{tpu_custom_call.1} parent=1 // pred_region
      _
    $region21: #{tpu_custom_call.1} parent=1 // pred_fallthru
      _
    // Predicated region
    $region22: #{tpu_custom_call.1} parent=1 // pred_check
      _
    $region23: #{tpu_custom_call.1} parent=1 // pred_check_branch
      %63 = sbr.rel (0) target = $region25
    $region24: #{tpu_custom_call.1} parent=1 // pred_region
      %s65 = ssub.s32 2048, 2048
      %66 = vsyncadd [#allocation10], %s65
      %s67 = sshll.u32 [#allocation11], 4
      %s68 = int_to_ptr.vmem [resolvable:$true] %s67
      %73 = dma.hbm_to_vmem [thread:$0]  %s5, 2048, %s68, [#allocation10], 64, 64, 4
    $region25: #{tpu_custom_call.1} parent=1 // pred_fallthru
      _
    // Predicated region
    $region26: #{tpu_custom_call.1} parent=1 // pred_check
      _
    $region27: #{tpu_custom_call.1} parent=1 // pred_check_branch
      %75 = sbr.rel (0) target = $region29
    $region28: #{tpu_custom_call.1} parent=1 // pred_region
      _
    $region29: #{tpu_custom_call.1} parent=1 // pred_fallthru
      _
    // Predicated region
    $region30: #{tpu_custom_call.1} parent=1 // pred_check
      _
    $region31: #{tpu_custom_call.1} parent=1 // pred_check_branch
      %77 = sbr.rel (0) target = $region33
    $region32: #{tpu_custom_call.1} parent=1 // pred_region
      %78 = dma.done [#allocation4], 64
    $region33: #{tpu_custom_call.1} parent=1 // pred_fallthru
      _
    // Predicated region
    $region34: #{tpu_custom_call.1} parent=1 // pred_check
      _
    $region35: #{tpu_custom_call.1} parent=1 // pred_check_branch
      %80 = sbr.rel (0) target = $region37
    $region36: #{tpu_custom_call.1} parent=1 // pred_region
      %81 = dma.done [#allocation7], 4096
    $region37: #{tpu_custom_call.1} parent=1 // pred_fallthru
      _
    // Predicated region
    $region38: #{tpu_custom_call.1} parent=1 // pred_check
      _
    $region39: #{tpu_custom_call.1} parent=1 // pred_check_branch
      %83 = sbr.rel (0) target = $region41
    $region40: #{tpu_custom_call.1} parent=1 // pred_region
      %84 = dma.done [#allocation7], 64
    $region41: #{tpu_custom_call.1} parent=1 // pred_fallthru
      _
    // Predicated region
    $region42: #{tpu_custom_call.1} parent=1 // pred_check
      _
    $region43: #{tpu_custom_call.1} parent=1 // pred_check_branch
      %86 = sbr.rel (0) target = $region45
    $region44: #{tpu_custom_call.1} parent=1 // pred_region
      %87 = dma.done [#allocation10], 8192
    $region45: #{tpu_custom_call.1} parent=1 // pred_fallthru
      _
    // Predicated region
    $region46: #{tpu_custom_call.1} parent=1 // pred_check
      _
    $region47: #{tpu_custom_call.1} parent=1 // pred_check_branch
      %89 = sbr.rel (0) target = $region49
    $region48: #{tpu_custom_call.1} parent=1 // pred_region
      %90 = dma.done [#allocation10], 2048
    $region49: #{tpu_custom_call.1} parent=1 // pred_fallthru
      _
    %p92 = scmp.eq.s32.totalorder 0, 0
    // Predicated region
    $region50: #{tpu_custom_call.1} parent=1 // pred_check
      %p93 = pneg %p92
    $region51: #{tpu_custom_call.1} parent=1 // pred_check_branch
      %95 = sbr.rel (%p93) target = $region53
    $region52: #{tpu_custom_call.1} parent=1 // pred_region
      %96 = vst [vmem:[#allocation2] sm:$0xff] 0.0
      %97 = vst [vmem:[#allocation2 + $0x8] sm:$0xff] 0.0
      %98 = vst [vmem:[#allocation2 + $0x10] sm:$0xff] 0.0
      %99 = vst [vmem:[#allocation2 + $0x18] sm:$0xff] 0.0
    $region53: #{tpu_custom_call.1} parent=1 // pred_fallthru
      _
    %v100 = vld [vmem:[#allocation3] sm:$0xf]
    %v101 = vld [vmem:[#allocation2] sm:$0xff]
    %v102 = vld [vmem:[#allocation2 + $0x8] sm:$0xff]
    %v103 = vld [vmem:[#allocation2 + $0x10] sm:$0xff]
    %v104 = vld [vmem:[#allocation2 + $0x18] sm:$0xff]
    %v105 = vld [vmem:[#allocation6] sm:$0xff]
    %v106 = vld [vmem:[#allocation6 + $0x8] sm:$0xff]
    %v107 = vld [vmem:[#allocation6 + $0x10] sm:$0xff]
    %v108 = vld [vmem:[#allocation6 + $0x18] sm:$0xff]
    %v109 = vld [vmem:[#allocation6 + $0x20] sm:$0xff]
    %v110 = vld [vmem:[#allocation6 + $0x28] sm:$0xff]
    %v111 = vld [vmem:[#allocation6 + $0x30] sm:$0xff]
    %v112 = vld [vmem:[#allocation6 + $0x38] sm:$0xff]
    %v113 = vld [vmem:[#allocation6 + $0x40] sm:$0xff]
    %v114 = vld [vmem:[#allocation6 + $0x48] sm:$0xff]
    %v115 = vld [vmem:[#allocation6 + $0x50] sm:$0xff]
    %v116 = vld [vmem:[#allocation6 + $0x58] sm:$0xff]
    %v117 = vld [vmem:[#allocation6 + $0x60] sm:$0xff]
    %v118 = vld [vmem:[#allocation6 + $0x68] sm:$0xff]
    %v119 = vld [vmem:[#allocation6 + $0x70] sm:$0xff]
    %v120 = vld [vmem:[#allocation6 + $0x78] sm:$0xff]
    %v121 = vld [vmem:[#allocation6 + $0x80] sm:$0xff]
    %v122 = vld [vmem:[#allocation6 + $0x88] sm:$0xff]
    %v123 = vld [vmem:[#allocation6 + $0x90] sm:$0xff]
    %v124 = vld [vmem:[#allocation6 + $0x98] sm:$0xff]
    %v125 = vld [vmem:[#allocation6 + $0xa0] sm:$0xff]
    %v126 = vld [vmem:[#allocation6 + $0xa8] sm:$0xff]
    %v127 = vld [vmem:[#allocation6 + $0xb0] sm:$0xff]
    %v128 = vld [vmem:[#allocation6 + $0xb8] sm:$0xff]
    %v129 = vld [vmem:[#allocation6 + $0xc0] sm:$0xff]
    %v130 = vld [vmem:[#allocation6 + $0xc8] sm:$0xff]
    %v131 = vld [vmem:[#allocation6 + $0xd0] sm:$0xff]
    %v132 = vld [vmem:[#allocation6 + $0xd8] sm:$0xff]
    %v133 = vld [vmem:[#allocation6 + $0xe0] sm:$0xff]
    %v134 = vld [vmem:[#allocation6 + $0xe8] sm:$0xff]
    %v135 = vld [vmem:[#allocation6 + $0xf0] sm:$0xff]
    %v136 = vld [vmem:[#allocation6 + $0xf8] sm:$0xff]
    %v169 = vunpack.c.l.b16 %v105
    %v170 = vunpack.c.h.b16 %v105
    %v171 = vunpack.c.l.b16 %v106
    %v172 = vunpack.c.h.b16 %v106
    %v173 = vunpack.c.l.b16 %v107
    %v174 = vunpack.c.h.b16 %v107
    %v175 = vunpack.c.l.b16 %v108
    %v176 = vunpack.c.h.b16 %v108
    %v177 = vunpack.c.l.b16 %v109
    %v178 = vunpack.c.h.b16 %v109
    %v179 = vunpack.c.l.b16 %v110
    %v180 = vunpack.c.h.b16 %v110
    %v181 = vunpack.c.l.b16 %v111
    %v182 = vunpack.c.h.b16 %v111
    %v183 = vunpack.c.l.b16 %v112
    %v184 = vunpack.c.h.b16 %v112
    %v185 = vunpack.c.l.b16 %v113
    %v186 = vunpack.c.h.b16 %v113
    %v187 = vunpack.c.l.b16 %v114
    %v188 = vunpack.c.h.b16 %v114
    %v189 = vunpack.c.l.b16 %v115
    %v190 = vunpack.c.h.b16 %v115
    %v191 = vunpack.c.l.b16 %v116
    %v192 = vunpack.c.h.b16 %v116
    %v193 = vunpack.c.l.b16 %v117
    %v194 = vunpack.c.h.b16 %v117
    %v195 = vunpack.c.l.b16 %v118
    %v196 = vunpack.c.h.b16 %v118
    %v197 = vunpack.c.l.b16 %v119
    %v198 = vunpack.c.h.b16 %v119
    %v199 = vunpack.c.l.b16 %v120
    %v200 = vunpack.c.h.b16 %v120
    %v201 = vunpack.c.l.b16 %v121
    %v202 = vunpack.c.h.b16 %v121
    %v203 = vunpack.c.l.b16 %v122
    %v204 = vunpack.c.h.b16 %v122
    %v205 = vunpack.c.l.b16 %v123
    %v206 = vunpack.c.h.b16 %v123
    %v207 = vunpack.c.l.b16 %v124
    %v208 = vunpack.c.h.b16 %v124
    %v209 = vunpack.c.l.b16 %v125
    %v210 = vunpack.c.h.b16 %v125
    %v211 = vunpack.c.l.b16 %v126
    %v212 = vunpack.c.h.b16 %v126
    %v213 = vunpack.c.l.b16 %v127
    %v214 = vunpack.c.h.b16 %v127
    %v215 = vunpack.c.l.b16 %v128
    %v216 = vunpack.c.h.b16 %v128
    %v217 = vunpack.c.l.b16 %v129
    %v218 = vunpack.c.h.b16 %v129
    %v219 = vunpack.c.l.b16 %v130
    %v220 = vunpack.c.h.b16 %v130
    %v221 = vunpack.c.l.b16 %v131
    %v222 = vunpack.c.h.b16 %v131
    %v223 = vunpack.c.l.b16 %v132
    %v224 = vunpack.c.h.b16 %v132
    %v225 = vunpack.c.l.b16 %v133
    %v226 = vunpack.c.h.b16 %v133
    %v227 = vunpack.c.l.b16 %v134
    %v228 = vunpack.c.h.b16 %v134
    %v229 = vunpack.c.l.b16 %v135
    %v230 = vunpack.c.h.b16 %v135
    %v231 = vunpack.c.l.b16 %v136
    %v232 = vunpack.c.h.b16 %v136
    %v233 = vpack.c.b16 %v173, %v169
    %v234 = vpack.c.b16 %v174, %v170
    %v235 = vpack.c.b16 %v175, %v171
    %v236 = vpack.c.b16 %v176, %v172
    %v237 = vpack.c.b16 %v181, %v177
    %v238 = vpack.c.b16 %v182, %v178
    %v239 = vpack.c.b16 %v183, %v179
    %v240 = vpack.c.b16 %v184, %v180
    %v241 = vpack.c.b16 %v189, %v185
    %v242 = vpack.c.b16 %v190, %v186
    %v243 = vpack.c.b16 %v191, %v187
    %v244 = vpack.c.b16 %v192, %v188
    %v245 = vpack.c.b16 %v197, %v193
    %v246 = vpack.c.b16 %v198, %v194
    %v247 = vpack.c.b16 %v199, %v195
    %v248 = vpack.c.b16 %v200, %v196
    %v249 = vpack.c.b16 %v205, %v201
    %v250 = vpack.c.b16 %v206, %v202
    %v251 = vpack.c.b16 %v207, %v203
    %v252 = vpack.c.b16 %v208, %v204
    %v253 = vpack.c.b16 %v213, %v209
    %v254 = vpack.c.b16 %v214, %v210
    %v255 = vpack.c.b16 %v215, %v211
    %v256 = vpack.c.b16 %v216, %v212
    %v257 = vpack.c.b16 %v221, %v217
    %v258 = vpack.c.b16 %v222, %v218
    %v259 = vpack.c.b16 %v223, %v219
    %v260 = vpack.c.b16 %v224, %v220
    %v261 = vpack.c.b16 %v229, %v225
    %v262 = vpack.c.b16 %v230, %v226
    %v263 = vpack.c.b16 %v231, %v227
    %v264 = vpack.c.b16 %v232, %v228
    %297 = vmatprep.subr.bf16.mxu0 %v262
    %298 = vmatpush1.bf16.msra.mxu0 %v261
    %299 = vmatprep.subr.bf16.mxu0 %v258
    %300 = vmatpush1.bf16.msra.mxu0 %v257
    %301 = vmatprep.subr.bf16.mxu0 %v254
    %302 = vmatpush1.bf16.msra.mxu0 %v253
    %303 = vmatprep.subr.bf16.mxu0 %v250
    %304 = vmatpush1.bf16.msra.mxu0 %v249
    %305 = vmatprep.subr.bf16.mxu0 %v246
    %306 = vmatpush1.bf16.msra.mxu0 %v245
    %307 = vmatprep.subr.bf16.mxu0 %v242
    %308 = vmatpush1.bf16.msra.mxu0 %v241
    %309 = vmatprep.subr.bf16.mxu0 %v238
    %310 = vmatpush1.bf16.msra.mxu0 %v237
    %311 = vmatprep.subr.bf16.mxu0 %v234
    %312 = vmatpush1.bf16.msra.mxu0 %v233
    %313 = vmatprep.subr.bf16.mxu0 0
    %314 = vmatpush2.bf16.msra.mxu0 0
    %315 = vmatprep.subr.bf16.mxu0 0
    %316 = vmatpush2.bf16.msra.mxu0 0
    %317 = vmatprep.subr.bf16.mxu0 0
    %318 = vmatpush2.bf16.msra.mxu0 0
    %319 = vmatprep.subr.bf16.mxu0 0
    %320 = vmatpush2.bf16.msra.mxu0 0
    %321 = vmatprep.subr.bf16.mxu0 0
    %322 = vmatpush2.bf16.msra.mxu0 0
    %323 = vmatprep.subr.bf16.mxu0 0
    %324 = vmatpush2.bf16.msra.mxu0 0
    %325 = vmatprep.subr.bf16.mxu0 0
    %326 = vmatpush2.bf16.msra.mxu0 0
    %327 = vmatprep.subr.bf16.mxu0 0
    %328 = vmatpush2.bf16.msra.mxu0 0
    %329 = vmatprep.mubr.bf16.mxu0 0
    %330 = vmatmul.mubr.bf16.gmra.mxu0 %v100
    %v331 = vpop.f32.mrf.mxu0
    %v332 = vadd.f32 0.0, %v331
    %v333 = vpop.f32.mrf.mxu0
    %v334 = vadd.f32 0.0, %v333
    %v335 = vpop.f32.mrf.mxu0
    %v336 = vpop.f32.mrf.mxu0
    %337 = vdwg.mxu0
    %338 = vmatprep.subr.bf16.mxu0 %v264
    %339 = vmatpush1.bf16.msra.mxu0 %v263
    %340 = vmatprep.subr.bf16.mxu0 %v260
    %341 = vmatpush1.bf16.msra.mxu0 %v259
    %342 = vmatprep.subr.bf16.mxu0 %v256
    %343 = vmatpush1.bf16.msra.mxu0 %v255
    %344 = vmatprep.subr.bf16.mxu0 %v252
    %345 = vmatpush1.bf16.msra.mxu0 %v251
    %346 = vmatprep.subr.bf16.mxu0 %v248
    %347 = vmatpush1.bf16.msra.mxu0 %v247
    %348 = vmatprep.subr.bf16.mxu0 %v244
    %349 = vmatpush1.bf16.msra.mxu0 %v243
    %350 = vmatprep.subr.bf16.mxu0 %v240
    %351 = vmatpush1.bf16.msra.mxu0 %v239
    %352 = vmatprep.subr.bf16.mxu0 %v236
    %353 = vmatpush1.bf16.msra.mxu0 %v235
    %354 = vmatprep.subr.bf16.mxu0 0
    %355 = vmatpush2.bf16.msra.mxu0 0
    %356 = vmatprep.subr.bf16.mxu0 0
    %357 = vmatpush2.bf16.msra.mxu0 0
    %358 = vmatprep.subr.bf16.mxu0 0
    %359 = vmatpush2.bf16.msra.mxu0 0
    %360 = vmatprep.subr.bf16.mxu0 0
    %361 = vmatpush2.bf16.msra.mxu0 0
    %362 = vmatprep.subr.bf16.mxu0 0
    %363 = vmatpush2.bf16.msra.mxu0 0
    %364 = vmatprep.subr.bf16.mxu0 0
    %365 = vmatpush2.bf16.msra.mxu0 0
    %366 = vmatprep.subr.bf16.mxu0 0
    %367 = vmatpush2.bf16.msra.mxu0 0
    %368 = vmatprep.subr.bf16.mxu0 0
    %369 = vmatpush2.bf16.msra.mxu0 0
    %370 = vmatprep.mubr.bf16.mxu0 0
    %371 = vmatmul.mubr.bf16.gmra.mxu0 %v100
    %v372 = vpop.f32.mrf.mxu0
    %v373 = vadd.f32 0.0, %v372
    %v374 = vpop.f32.mrf.mxu0
    %v375 = vadd.f32 0.0, %v374
    %v376 = vpop.f32.mrf.mxu0
    %v377 = vpop.f32.mrf.mxu0
    %378 = vdwg.mxu0
    %v379 = vadd.f32 %v101, %v332
    %v380 = vadd.f32 %v102, %v334
    %v381 = vadd.f32 %v103, %v373
    %v382 = vadd.f32 %v104, %v375
    %383 = vst [vmem:[#allocation2] sm:$0xff] %v379
    %384 = vst [vmem:[#allocation2 + $0x8] sm:$0xff] %v380
    %385 = vst [vmem:[#allocation2 + $0x10] sm:$0xff] %v381
    %386 = vst [vmem:[#allocation2 + $0x18] sm:$0xff] %v382
    // Predicated region
    $region54: #{tpu_custom_call.1} parent=1 // pred_check
      %p387 = pneg %p92
    $region55: #{tpu_custom_call.1} parent=1 // pred_check_branch
      %389 = sbr.rel (%p387) target = $region57
    $region56: #{tpu_custom_call.1} parent=1 // pred_region
      %v390 = vld [vmem:[#allocation2] sm:$0xff]
      %v391 = vld [vmem:[#allocation2 + $0x8] sm:$0xff]
      %v392 = vld [vmem:[#allocation2 + $0x10] sm:$0xff]
      %v393 = vld [vmem:[#allocation2 + $0x18] sm:$0xff]
      %v394 = vld [vmem:[#allocation8] sm:$0xf]
      %v396 = vlaneseq
      %v397 = vshrl.u32 %v396, 7
      %v398 = vsub.s32 0, %v397
      %v399 = vrot.slane %v394, %v398
      %v400 = vlaneseq
      %v401 = vshrl.u32 %v400, 7
      %v402 = vsub.s32 1, %v401
      %v403 = vrot.slane %v394, %v402
      %v404 = vlaneseq
      %v405 = vshrl.u32 %v404, 7
      %v406 = vsub.s32 2, %v405
      %v407 = vrot.slane %v394, %v406
      %v408 = vlaneseq
      %v409 = vshrl.u32 %v408, 7
      %v410 = vsub.s32 3, %v409
      %v411 = vrot.slane %v394, %v410
      %v416 = vadd.f32 %v390, %v399
      %v417 = vadd.f32 %v391, %v403
      %v418 = vadd.f32 %v392, %v407
      %v419 = vadd.f32 %v393, %v411
      %v420 = vmax.f32 %v416, 0.0
      %v421 = vmax.f32 %v417, 0.0
      %v422 = vmax.f32 %v418, 0.0
      %v423 = vmax.f32 %v419, 0.0
      %v424 = vpack.c.bf16 %v420, %v420
      %v425 = vpack.c.bf16 %v421, %v421
      %v426 = vpack.c.bf16 %v422, %v422
      %v427 = vpack.c.bf16 %v423, %v423
      %v428 = vld [vmem:[#allocation9] sm:$0xff]
      %v429 = vld [vmem:[#allocation9 + $0x8] sm:$0xff]
      %v430 = vld [vmem:[#allocation9 + $0x10] sm:$0xff]
      %v431 = vld [vmem:[#allocation9 + $0x18] sm:$0xff]
      %v432 = vld [vmem:[#allocation9 + $0x20] sm:$0xff]
      %v433 = vld [vmem:[#allocation9 + $0x28] sm:$0xff]
      %v434 = vld [vmem:[#allocation9 + $0x30] sm:$0xff]
      %v435 = vld [vmem:[#allocation9 + $0x38] sm:$0xff]
      %v436 = vld [vmem:[#allocation9 + $0x40] sm:$0xff]
      %v437 = vld [vmem:[#allocation9 + $0x48] sm:$0xff]
      %v438 = vld [vmem:[#allocation9 + $0x50] sm:$0xff]
      %v439 = vld [vmem:[#allocation9 + $0x58] sm:$0xff]
      %v440 = vld [vmem:[#allocation9 + $0x60] sm:$0xff]
      %v441 = vld [vmem:[#allocation9 + $0x68] sm:$0xff]
      %v442 = vld [vmem:[#allocation9 + $0x70] sm:$0xff]
      %v443 = vld [vmem:[#allocation9 + $0x78] sm:$0xff]
      %v444 = vld [vmem:[#allocation9 + $0x80] sm:$0xff]
      %v445 = vld [vmem:[#allocation9 + $0x88] sm:$0xff]
      %v446 = vld [vmem:[#allocation9 + $0x90] sm:$0xff]
      %v447 = vld [vmem:[#allocation9 + $0x98] sm:$0xff]
      %v448 = vld [vmem:[#allocation9 + $0xa0] sm:$0xff]
      %v449 = vld [vmem:[#allocation9 + $0xa8] sm:$0xff]
      %v450 = vld [vmem:[#allocation9 + $0xb0] sm:$0xff]
      %v451 = vld [vmem:[#allocation9 + $0xb8] sm:$0xff]
      %v452 = vld [vmem:[#allocation9 + $0xc0] sm:$0xff]
      %v453 = vld [vmem:[#allocation9 + $0xc8] sm:$0xff]
      %v454 = vld [vmem:[#allocation9 + $0xd0] sm:$0xff]
      %v455 = vld [vmem:[#allocation9 + $0xd8] sm:$0xff]
      %v456 = vld [vmem:[#allocation9 + $0xe0] sm:$0xff]
      %v457 = vld [vmem:[#allocation9 + $0xe8] sm:$0xff]
      %v458 = vld [vmem:[#allocation9 + $0xf0] sm:$0xff]
      %v459 = vld [vmem:[#allocation9 + $0xf8] sm:$0xff]
      %v460 = vld [vmem:[#allocation9 + $0x100] sm:$0xff]
      %v461 = vld [vmem:[#allocation9 + $0x108] sm:$0xff]
      %v462 = vld [vmem:[#allocation9 + $0x110] sm:$0xff]
      %v463 = vld [vmem:[#allocation9 + $0x118] sm:$0xff]
      %v464 = vld [vmem:[#allocation9 + $0x120] sm:$0xff]
      %v465 = vld [vmem:[#allocation9 + $0x128] sm:$0xff]
      %v466 = vld [vmem:[#allocation9 + $0x130] sm:$0xff]
      %v467 = vld [vmem:[#allocation9 + $0x138] sm:$0xff]
      %v468 = vld [vmem:[#allocation9 + $0x140] sm:$0xff]
      %v469 = vld [vmem:[#allocation9 + $0x148] sm:$0xff]
      %v470 = vld [vmem:[#allocation9 + $0x150] sm:$0xff]
      %v471 = vld [vmem:[#allocation9 + $0x158] sm:$0xff]
      %v472 = vld [vmem:[#allocation9 + $0x160] sm:$0xff]
      %v473 = vld [vmem:[#allocation9 + $0x168] sm:$0xff]
      %v474 = vld [vmem:[#allocation9 + $0x170] sm:$0xff]
      %v475 = vld [vmem:[#allocation9 + $0x178] sm:$0xff]
      %v476 = vld [vmem:[#allocation9 + $0x180] sm:$0xff]
      %v477 = vld [vmem:[#allocation9 + $0x188] sm:$0xff]
      %v478 = vld [vmem:[#allocation9 + $0x190] sm:$0xff]
      %v479 = vld [vmem:[#allocation9 + $0x198] sm:$0xff]
      %v480 = vld [vmem:[#allocation9 + $0x1a0] sm:$0xff]
      %v481 = vld [vmem:[#allocation9 + $0x1a8] sm:$0xff]
      %v482 = vld [vmem:[#allocation9 + $0x1b0] sm:$0xff]
      %v483 = vld [vmem:[#allocation9 + $0x1b8] sm:$0xff]
      %v484 = vld [vmem:[#allocation9 + $0x1c0] sm:$0xff]
      %v485 = vld [vmem:[#allocation9 + $0x1c8] sm:$0xff]
      %v486 = vld [vmem:[#allocation9 + $0x1d0] sm:$0xff]
      %v487 = vld [vmem:[#allocation9 + $0x1d8] sm:$0xff]
      %v488 = vld [vmem:[#allocation9 + $0x1e0] sm:$0xff]
      %v489 = vld [vmem:[#allocation9 + $0x1e8] sm:$0xff]
      %v490 = vld [vmem:[#allocation9 + $0x1f0] sm:$0xff]
      %v491 = vld [vmem:[#allocation9 + $0x1f8] sm:$0xff]
      %v492 = vld [vmem:[%s4] sm:$0x3]
      %v494 = vlaneseq
      %v495 = vshrl.u32 %v494, 7
      %v496 = vsub.s32 0, %v495
      %v497 = vrot.slane %v492, %v496
      %v498 = vlaneseq
      %v499 = vshrl.u32 %v498, 7
      %v500 = vsub.s32 1, %v499
      %v501 = vrot.slane %v492, %v500
      %v568 = vunpack.c.l.b16 %v428
      %v569 = vunpack.c.h.b16 %v428
      %v570 = vunpack.c.l.b16 %v429
      %v571 = vunpack.c.h.b16 %v429
      %v572 = vunpack.c.l.b16 %v430
      %v573 = vunpack.c.h.b16 %v430
      %v574 = vunpack.c.l.b16 %v431
      %v575 = vunpack.c.h.b16 %v431
      %v576 = vunpack.c.l.b16 %v432
      %v577 = vunpack.c.h.b16 %v432
      %v578 = vunpack.c.l.b16 %v433
      %v579 = vunpack.c.h.b16 %v433
      %v580 = vunpack.c.l.b16 %v434
      %v581 = vunpack.c.h.b16 %v434
      %v582 = vunpack.c.l.b16 %v435
      %v583 = vunpack.c.h.b16 %v435
      %v584 = vunpack.c.l.b16 %v436
      %v585 = vunpack.c.h.b16 %v436
      %v586 = vunpack.c.l.b16 %v437
      %v587 = vunpack.c.h.b16 %v437
      %v588 = vunpack.c.l.b16 %v438
      %v589 = vunpack.c.h.b16 %v438
      %v590 = vunpack.c.l.b16 %v439
      %v591 = vunpack.c.h.b16 %v439
      %v592 = vunpack.c.l.b16 %v440
      %v593 = vunpack.c.h.b16 %v440
      %v594 = vunpack.c.l.b16 %v441
      %v595 = vunpack.c.h.b16 %v441
      %v596 = vunpack.c.l.b16 %v442
      %v597 = vunpack.c.h.b16 %v442
      %v598 = vunpack.c.l.b16 %v443
      %v599 = vunpack.c.h.b16 %v443
      %v600 = vunpack.c.l.b16 %v444
      %v601 = vunpack.c.h.b16 %v444
      %v602 = vunpack.c.l.b16 %v445
      %v603 = vunpack.c.h.b16 %v445
      %v604 = vunpack.c.l.b16 %v446
      %v605 = vunpack.c.h.b16 %v446
      %v606 = vunpack.c.l.b16 %v447
      %v607 = vunpack.c.h.b16 %v447
      %v608 = vunpack.c.l.b16 %v448
      %v609 = vunpack.c.h.b16 %v448
      %v610 = vunpack.c.l.b16 %v449
      %v611 = vunpack.c.h.b16 %v449
      %v612 = vunpack.c.l.b16 %v450
      %v613 = vunpack.c.h.b16 %v450
      %v614 = vunpack.c.l.b16 %v451
      %v615 = vunpack.c.h.b16 %v451
      %v616 = vunpack.c.l.b16 %v452
      %v617 = vunpack.c.h.b16 %v452
      %v618 = vunpack.c.l.b16 %v453
      %v619 = vunpack.c.h.b16 %v453
      %v620 = vunpack.c.l.b16 %v454
      %v621 = vunpack.c.h.b16 %v454
      %v622 = vunpack.c.l.b16 %v455
      %v623 = vunpack.c.h.b16 %v455
      %v624 = vunpack.c.l.b16 %v456
      %v625 = vunpack.c.h.b16 %v456
      %v626 = vunpack.c.l.b16 %v457
      %v627 = vunpack.c.h.b16 %v457
      %v628 = vunpack.c.l.b16 %v458
      %v629 = vunpack.c.h.b16 %v458
      %v630 = vunpack.c.l.b16 %v459
      %v631 = vunpack.c.h.b16 %v459
      %v632 = vunpack.c.l.b16 %v460
      %v633 = vunpack.c.h.b16 %v460
      %v634 = vunpack.c.l.b16 %v461
      %v635 = vunpack.c.h.b16 %v461
      %v636 = vunpack.c.l.b16 %v462
      %v637 = vunpack.c.h.b16 %v462
      %v638 = vunpack.c.l.b16 %v463
      %v639 = vunpack.c.h.b16 %v463
      %v640 = vunpack.c.l.b16 %v464
      %v641 = vunpack.c.h.b16 %v464
      %v642 = vunpack.c.l.b16 %v465
      %v643 = vunpack.c.h.b16 %v465
      %v644 = vunpack.c.l.b16 %v466
      %v645 = vunpack.c.h.b16 %v466
      %v646 = vunpack.c.l.b16 %v467
      %v647 = vunpack.c.h.b16 %v467
      %v648 = vunpack.c.l.b16 %v468
      %v649 = vunpack.c.h.b16 %v468
      %v650 = vunpack.c.l.b16 %v469
      %v651 = vunpack.c.h.b16 %v469
      %v652 = vunpack.c.l.b16 %v470
      %v653 = vunpack.c.h.b16 %v470
      %v654 = vunpack.c.l.b16 %v471
      %v655 = vunpack.c.h.b16 %v471
      %v656 = vunpack.c.l.b16 %v472
      %v657 = vunpack.c.h.b16 %v472
      %v658 = vunpack.c.l.b16 %v473
      %v659 = vunpack.c.h.b16 %v473
      %v660 = vunpack.c.l.b16 %v474
      %v661 = vunpack.c.h.b16 %v474
      %v662 = vunpack.c.l.b16 %v475
      %v663 = vunpack.c.h.b16 %v475
      %v664 = vunpack.c.l.b16 %v476
      %v665 = vunpack.c.h.b16 %v476
      %v666 = vunpack.c.l.b16 %v477
      %v667 = vunpack.c.h.b16 %v477
      %v668 = vunpack.c.l.b16 %v478
      %v669 = vunpack.c.h.b16 %v478
      %v670 = vunpack.c.l.b16 %v479
      %v671 = vunpack.c.h.b16 %v479
      %v672 = vunpack.c.l.b16 %v480
      %v673 = vunpack.c.h.b16 %v480
      %v674 = vunpack.c.l.b16 %v481
      %v675 = vunpack.c.h.b16 %v481
      %v676 = vunpack.c.l.b16 %v482
      %v677 = vunpack.c.h.b16 %v482
      %v678 = vunpack.c.l.b16 %v483
      %v679 = vunpack.c.h.b16 %v483
      %v680 = vunpack.c.l.b16 %v484
      %v681 = vunpack.c.h.b16 %v484
      %v682 = vunpack.c.l.b16 %v485
      %v683 = vunpack.c.h.b16 %v485
      %v684 = vunpack.c.l.b16 %v486
      %v685 = vunpack.c.h.b16 %v486
      %v686 = vunpack.c.l.b16 %v487
      %v687 = vunpack.c.h.b16 %v487
      %v688 = vunpack.c.l.b16 %v488
      %v689 = vunpack.c.h.b16 %v488
      %v690 = vunpack.c.l.b16 %v489
      %v691 = vunpack.c.h.b16 %v489
      %v692 = vunpack.c.l.b16 %v490
      %v693 = vunpack.c.h.b16 %v490
      %v694 = vunpack.c.l.b16 %v491
      %v695 = vunpack.c.h.b16 %v491
      %v696 = vpack.c.b16 %v570, %v568
      %v697 = vpack.c.b16 %v571, %v569
      %v698 = vpack.c.b16 %v574, %v572
      %v699 = vpack.c.b16 %v575, %v573
      %v700 = vpack.c.b16 %v578, %v576
      %v701 = vpack.c.b16 %v579, %v577
      %v702 = vpack.c.b16 %v582, %v580
      %v703 = vpack.c.b16 %v583, %v581
      %v704 = vpack.c.b16 %v586, %v584
      %v705 = vpack.c.b16 %v587, %v585
      %v706 = vpack.c.b16 %v590, %v588
      %v707 = vpack.c.b16 %v591, %v589
      %v708 = vpack.c.b16 %v594, %v592
      %v709 = vpack.c.b16 %v595, %v593
      %v710 = vpack.c.b16 %v598, %v596
      %v711 = vpack.c.b16 %v599, %v597
      %v712 = vpack.c.b16 %v602, %v600
      %v713 = vpack.c.b16 %v603, %v601
      %v714 = vpack.c.b16 %v606, %v604
      %v715 = vpack.c.b16 %v607, %v605
      %v716 = vpack.c.b16 %v610, %v608
      %v717 = vpack.c.b16 %v611, %v609
      %v718 = vpack.c.b16 %v614, %v612
      %v719 = vpack.c.b16 %v615, %v613
      %v720 = vpack.c.b16 %v618, %v616
      %v721 = vpack.c.b16 %v619, %v617
      %v722 = vpack.c.b16 %v622, %v620
      %v723 = vpack.c.b16 %v623, %v621
      %v724 = vpack.c.b16 %v626, %v624
      %v725 = vpack.c.b16 %v627, %v625
      %v726 = vpack.c.b16 %v630, %v628
      %v727 = vpack.c.b16 %v631, %v629
      %v728 = vpack.c.b16 %v634, %v632
      %v729 = vpack.c.b16 %v635, %v633
      %v730 = vpack.c.b16 %v638, %v636
      %v731 = vpack.c.b16 %v639, %v637
      %v732 = vpack.c.b16 %v642, %v640
      %v733 = vpack.c.b16 %v643, %v641
      %v734 = vpack.c.b16 %v646, %v644
      %v735 = vpack.c.b16 %v647, %v645
      %v736 = vpack.c.b16 %v650, %v648
      %v737 = vpack.c.b16 %v651, %v649
      %v738 = vpack.c.b16 %v654, %v652
      %v739 = vpack.c.b16 %v655, %v653
      %v740 = vpack.c.b16 %v658, %v656
      %v741 = vpack.c.b16 %v659, %v657
      %v742 = vpack.c.b16 %v662, %v660
      %v743 = vpack.c.b16 %v663, %v661
      %v744 = vpack.c.b16 %v666, %v664
      %v745 = vpack.c.b16 %v667, %v665
      %v746 = vpack.c.b16 %v670, %v668
      %v747 = vpack.c.b16 %v671, %v669
      %v748 = vpack.c.b16 %v674, %v672
      %v749 = vpack.c.b16 %v675, %v673
      %v750 = vpack.c.b16 %v678, %v676
      %v751 = vpack.c.b16 %v679, %v677
      %v752 = vpack.c.b16 %v682, %v680
      %v753 = vpack.c.b16 %v683, %v681
      %v754 = vpack.c.b16 %v686, %v684
      %v755 = vpack.c.b16 %v687, %v685
      %v756 = vpack.c.b16 %v690, %v688
      %v757 = vpack.c.b16 %v691, %v689
      %v758 = vpack.c.b16 %v694, %v692
      %v759 = vpack.c.b16 %v695, %v693
      %824 = vmatprep.subr.bf16.mxu0 %v711
      %825 = vmatpush1.bf16.msra.mxu0 %v710
      %826 = vmatprep.subr.bf16.mxu0 %v709
      %827 = vmatpush1.bf16.msra.mxu0 %v708
      %828 = vmatprep.subr.bf16.mxu0 %v707
      %829 = vmatpush1.bf16.msra.mxu0 %v706
      %830 = vmatprep.subr.bf16.mxu0 %v705
      %831 = vmatpush1.bf16.msra.mxu0 %v704
      %832 = vmatprep.subr.bf16.mxu0 %v703
      %833 = vmatpush1.bf16.msra.mxu0 %v702
      %834 = vmatprep.subr.bf16.mxu0 %v701
      %835 = vmatpush1.bf16.msra.mxu0 %v700
      %836 = vmatprep.subr.bf16.mxu0 %v699
      %837 = vmatpush1.bf16.msra.mxu0 %v698
      %838 = vmatprep.subr.bf16.mxu0 %v697
      %839 = vmatpush1.bf16.msra.mxu0 %v696
      %840 = vmatprep.subr.bf16.mxu0 %v727
      %841 = vmatpush2.bf16.msra.mxu0 %v726
      %842 = vmatprep.subr.bf16.mxu0 %v725
      %843 = vmatpush2.bf16.msra.mxu0 %v724
      %844 = vmatprep.subr.bf16.mxu0 %v723
      %845 = vmatpush2.bf16.msra.mxu0 %v722
      %846 = vmatprep.subr.bf16.mxu0 %v721
      %847 = vmatpush2.bf16.msra.mxu0 %v720
      %848 = vmatprep.subr.bf16.mxu0 %v719
      %849 = vmatpush2.bf16.msra.mxu0 %v718
      %850 = vmatprep.subr.bf16.mxu0 %v717
      %851 = vmatpush2.bf16.msra.mxu0 %v716
      %852 = vmatprep.subr.bf16.mxu0 %v715
      %853 = vmatpush2.bf16.msra.mxu0 %v714
      %854 = vmatprep.subr.bf16.mxu0 %v713
      %855 = vmatpush2.bf16.msra.mxu0 %v712
      %856 = vmatprep.mubr.bf16.mxu0 %v425
      %857 = vmatmul.mubr.bf16.gmra.mxu0 %v424
      %v858 = vpop.f32.mrf.mxu0
      %v859 = vadd.f32 %v497, %v858
      %v860 = vpop.f32.mrf.mxu0
      %v861 = vadd.f32 %v501, %v860
      %v862 = vpop.f32.mrf.mxu0
      %v863 = vpop.f32.mrf.mxu0
      %864 = vdwg.mxu0
      %865 = vmatprep.subr.bf16.mxu0 %v743
      %866 = vmatpush1.bf16.msra.mxu0 %v742
      %867 = vmatprep.subr.bf16.mxu0 %v741
      %868 = vmatpush1.bf16.msra.mxu0 %v740
      %869 = vmatprep.subr.bf16.mxu0 %v739
      %870 = vmatpush1.bf16.msra.mxu0 %v738
      %871 = vmatprep.subr.bf16.mxu0 %v737
      %872 = vmatpush1.bf16.msra.mxu0 %v736
      %873 = vmatprep.subr.bf16.mxu0 %v735
      %874 = vmatpush1.bf16.msra.mxu0 %v734
      %875 = vmatprep.subr.bf16.mxu0 %v733
      %876 = vmatpush1.bf16.msra.mxu0 %v732
      %877 = vmatprep.subr.bf16.mxu0 %v731
      %878 = vmatpush1.bf16.msra.mxu0 %v730
      %879 = vmatprep.subr.bf16.mxu0 %v729
      %880 = vmatpush1.bf16.msra.mxu0 %v728
      %881 = vmatprep.subr.bf16.mxu0 %v759
      %882 = vmatpush2.bf16.msra.mxu0 %v758
      %883 = vmatprep.subr.bf16.mxu0 %v757
      %884 = vmatpush2.bf16.msra.mxu0 %v756
      %885 = vmatprep.subr.bf16.mxu0 %v755
      %886 = vmatpush2.bf16.msra.mxu0 %v754
      %887 = vmatprep.subr.bf16.mxu0 %v753
      %888 = vmatpush2.bf16.msra.mxu0 %v752
      %889 = vmatprep.subr.bf16.mxu0 %v751
      %890 = vmatpush2.bf16.msra.mxu0 %v750
      %891 = vmatprep.subr.bf16.mxu0 %v749
      %892 = vmatpush2.bf16.msra.mxu0 %v748
      %893 = vmatprep.subr.bf16.mxu0 %v747
      %894 = vmatpush2.bf16.msra.mxu0 %v746
      %895 = vmatprep.subr.bf16.mxu0 %v745
      %896 = vmatpush2.bf16.msra.mxu0 %v744
      %897 = vmatprep.mubr.bf16.mxu0 %v427
      %898 = vmatmul.mubr.bf16.gmra.mxu0 %v426
      %v899 = vpop.f32.mrf.mxu0
      %v900 = vadd.f32 %v859, %v899
      %v901 = vpop.f32.mrf.mxu0
      %v902 = vadd.f32 %v861, %v901
      %v903 = vpop.f32.mrf.mxu0
      %v904 = vpop.f32.mrf.mxu0
      %905 = vdwg.mxu0
      %v906 = vmax.f32 %v900, 0.0
      %v907 = vmax.f32 %v902, 0.0
      %v908 = vpack.c.bf16 %v906, %v906
      %v909 = vpack.c.bf16 %v907, %v907
      %v910 = vld [vmem:[#allocation11] sm:$0xf]
      %v911 = vld [vmem:[#allocation11 + $0x4] sm:$0xf]
      %v912 = vld [vmem:[#allocation11 + $0x8] sm:$0xf]
      %v913 = vld [vmem:[#allocation11 + $0xc] sm:$0xf]
      %v914 = vld [vmem:[#allocation11 + $0x10] sm:$0xf]
      %v915 = vld [vmem:[#allocation11 + $0x14] sm:$0xf]
      %v916 = vld [vmem:[#allocation11 + $0x18] sm:$0xf]
      %v917 = vld [vmem:[#allocation11 + $0x1c] sm:$0xf]
      %v918 = vld [vmem:[#allocation11 + $0x20] sm:$0xf]
      %v919 = vld [vmem:[#allocation11 + $0x24] sm:$0xf]
      %v920 = vld [vmem:[#allocation11 + $0x28] sm:$0xf]
      %v921 = vld [vmem:[#allocation11 + $0x2c] sm:$0xf]
      %v922 = vld [vmem:[#allocation11 + $0x30] sm:$0xf]
      %v923 = vld [vmem:[#allocation11 + $0x34] sm:$0xf]
      %v924 = vld [vmem:[#allocation11 + $0x38] sm:$0xf]
      %v925 = vld [vmem:[#allocation11 + $0x3c] sm:$0xf]
      %v926 = vld [vmem:[#allocation11 + $0x40] sm:$0xf]
      %v927 = vld [vmem:[#allocation11 + $0x44] sm:$0xf]
      %v928 = vld [vmem:[#allocation11 + $0x48] sm:$0xf]
      %v929 = vld [vmem:[#allocation11 + $0x4c] sm:$0xf]
      %v930 = vld [vmem:[#allocation11 + $0x50] sm:$0xf]
      %v931 = vld [vmem:[#allocation11 + $0x54] sm:$0xf]
      %v932 = vld [vmem:[#allocation11 + $0x58] sm:$0xf]
      %v933 = vld [vmem:[#allocation11 + $0x5c] sm:$0xf]
      %v934 = vld [vmem:[#allocation11 + $0x60] sm:$0xf]
      %v935 = vld [vmem:[#allocation11 + $0x64] sm:$0xf]
      %v936 = vld [vmem:[#allocation11 + $0x68] sm:$0xf]
      %v937 = vld [vmem:[#allocation11 + $0x6c] sm:$0xf]
      %v938 = vld [vmem:[#allocation11 + $0x70] sm:$0xf]
      %v939 = vld [vmem:[#allocation11 + $0x74] sm:$0xf]
      %v940 = vld [vmem:[#allocation11 + $0x78] sm:$0xf]
      %v941 = vld [vmem:[#allocation11 + $0x7c] sm:$0xf]
      %v942 = vld [vmem:[%s6] sm:$0x1]
      %v944 = vlaneseq
      %v945 = vshrl.u32 %v944, 7
      %v946 = vsub.s32 0, %v945
      %v947 = vrot.slane %v942, %v946
      %v981 = vunpack.c.l.b16 %v910
      %v982 = vunpack.c.l.b16 %v911
      %v983 = vunpack.c.l.b16 %v912
      %v984 = vunpack.c.l.b16 %v913
      %v985 = vunpack.c.l.b16 %v914
      %v986 = vunpack.c.l.b16 %v915
      %v987 = vunpack.c.l.b16 %v916
      %v988 = vunpack.c.l.b16 %v917
      %v989 = vunpack.c.l.b16 %v918
      %v990 = vunpack.c.l.b16 %v919
      %v991 = vunpack.c.l.b16 %v920
      %v992 = vunpack.c.l.b16 %v921
      %v993 = vunpack.c.l.b16 %v922
      %v994 = vunpack.c.l.b16 %v923
      %v995 = vunpack.c.l.b16 %v924
      %v996 = vunpack.c.l.b16 %v925
      %v997 = vunpack.c.l.b16 %v926
      %v998 = vunpack.c.l.b16 %v927
      %v999 = vunpack.c.l.b16 %v928
      %v1000 = vunpack.c.l.b16 %v929
      %v1001 = vunpack.c.l.b16 %v930
      %v1002 = vunpack.c.l.b16 %v931
      %v1003 = vunpack.c.l.b16 %v932
      %v1004 = vunpack.c.l.b16 %v933
      %v1005 = vunpack.c.l.b16 %v934
      %v1006 = vunpack.c.l.b16 %v935
      %v1007 = vunpack.c.l.b16 %v936
      %v1008 = vunpack.c.l.b16 %v937
      %v1009 = vunpack.c.l.b16 %v938
      %v1010 = vunpack.c.l.b16 %v939
      %v1011 = vunpack.c.l.b16 %v940
      %v1012 = vunpack.c.l.b16 %v941
      %v1013 = vpack.c.b16 %v982, %v981
      %v1014 = vpack.c.b16 %v984, %v983
      %v1015 = vpack.c.b16 %v986, %v985
      %v1016 = vpack.c.b16 %v988, %v987
      %v1017 = vpack.c.b16 %v990, %v989
      %v1018 = vpack.c.b16 %v992, %v991
      %v1019 = vpack.c.b16 %v994, %v993
      %v1020 = vpack.c.b16 %v996, %v995
      %v1021 = vpack.c.b16 %v998, %v997
      %v1022 = vpack.c.b16 %v1000, %v999
      %v1023 = vpack.c.b16 %v1002, %v1001
      %v1024 = vpack.c.b16 %v1004, %v1003
      %v1025 = vpack.c.b16 %v1006, %v1005
      %v1026 = vpack.c.b16 %v1008, %v1007
      %v1027 = vpack.c.b16 %v1010, %v1009
      %v1028 = vpack.c.b16 %v1012, %v1011
      %1045 = vmatprep.subr.bf16.mxu0 0
      %1046 = vmatpush1.bf16.msra.mxu0 %v1020
      %1047 = vmatprep.subr.bf16.mxu0 0
      %1048 = vmatpush1.bf16.msra.mxu0 %v1019
      %1049 = vmatprep.subr.bf16.mxu0 0
      %1050 = vmatpush1.bf16.msra.mxu0 %v1018
      %1051 = vmatprep.subr.bf16.mxu0 0
      %1052 = vmatpush1.bf16.msra.mxu0 %v1017
      %1053 = vmatprep.subr.bf16.mxu0 0
      %1054 = vmatpush1.bf16.msra.mxu0 %v1016
      %1055 = vmatprep.subr.bf16.mxu0 0
      %1056 = vmatpush1.bf16.msra.mxu0 %v1015
      %1057 = vmatprep.subr.bf16.mxu0 0
      %1058 = vmatpush1.bf16.msra.mxu0 %v1014
      %1059 = vmatprep.subr.bf16.mxu0 0
      %1060 = vmatpush1.bf16.msra.mxu0 %v1013
      %1061 = vmatprep.subr.bf16.mxu0 0
      %1062 = vmatpush2.bf16.msra.mxu0 %v1028
      %1063 = vmatprep.subr.bf16.mxu0 0
      %1064 = vmatpush2.bf16.msra.mxu0 %v1027
      %1065 = vmatprep.subr.bf16.mxu0 0
      %1066 = vmatpush2.bf16.msra.mxu0 %v1026
      %1067 = vmatprep.subr.bf16.mxu0 0
      %1068 = vmatpush2.bf16.msra.mxu0 %v1025
      %1069 = vmatprep.subr.bf16.mxu0 0
      %1070 = vmatpush2.bf16.msra.mxu0 %v1024
      %1071 = vmatprep.subr.bf16.mxu0 0
      %1072 = vmatpush2.bf16.msra.mxu0 %v1023
      %1073 = vmatprep.subr.bf16.mxu0 0
      %1074 = vmatpush2.bf16.msra.mxu0 %v1022
      %1075 = vmatprep.subr.bf16.mxu0 0
      %1076 = vmatpush2.bf16.msra.mxu0 %v1021
      %1077 = vmatprep.mubr.bf16.mxu0 %v909
      %1078 = vmatmul.mubr.bf16.gmra.mxu0 %v908
      %v1079 = vpop.f32.mrf.mxu0
      %v1080 = vadd.f32 %v947, %v1079
      %v1081 = vpop.f32.mrf.mxu0
      %v1082 = vpop.f32.mrf.mxu0
      %v1083 = vpop.f32.mrf.mxu0
      %1084 = vdwg.mxu0
      %1085 = vst [vmem:[#allocation12] sm:$0xff] %v1080
    $region57: #{tpu_custom_call.1} parent=1 // pred_fallthru
      _
    // Predicated region
    $region58: #{tpu_custom_call.1} parent=1 // pred_check
      _
    $region59: #{tpu_custom_call.1} parent=1 // pred_check_branch
      %1087 = sbr.rel (0) target = $region61
    $region60: #{tpu_custom_call.1} parent=1 // pred_region
      %s1089 = ssub.s32 128, 128
      %1090 = vsyncadd [#allocation5], %s1089
      %s1092 = sshll.u32 [#allocation12], 4
      %s1093 = int_to_ptr.vmem [resolvable:$true] %s1092
      %1095 = dma.vmem_to_hbm [thread:$0]  %s1093, 128, %s7, [#allocation5]
    $region61: #{tpu_custom_call.1} parent=1 // pred_fallthru
      _
    // Predicated region
    $region62: #{tpu_custom_call.1} parent=1 // pred_check
      _
    $region63: #{tpu_custom_call.1} parent=1 // pred_check_branch
      %1097 = sbr.rel (0) target = $region65
    $region64: #{tpu_custom_call.1} parent=1 // pred_region
      %1098 = dma.done [#allocation5], 128
    $region65: #{tpu_custom_call.1} parent=1 // pred_fallthru
      _
    %1099 = vsyncpa [#allocation4], 1
    %1100 = vsyncpa [#allocation7], 1
    %1101 = vsyncpa [#allocation10], 1
    %1102 = vsyncpa [#allocation5], 1

</llo_original>
